<compile_context>
chip_gen: v5e
topology: v5e:2x2
jax: 0.10.0
libtpu: 0.0.40
codegen_flags: <defaults>
</compile_context>

<pallas_src>
import jax
import jax.numpy as jnp
from jax.experimental import pallas as pl
from jax.experimental.pallas import tpu as pltpu


# ----------------------------- Pallas kernels --------------------------------
def _sage_layer_kernel(a_ref, z_ref, xs_ref, wl_ref, wr_ref, b_ref,
                       out_ref, acc_ref):
    """SAGEConv (narrow-input ordering): acc += A @ x; h = relu(acc@Wl + x@Wr + b)."""
    k = pl.program_id(1)

    @pl.when(k == 0)
    def _():
        acc_ref[...] = jnp.zeros_like(acc_ref)

    # reduction step: pure MXU + fp32 accumulate
    acc_ref[...] += jnp.dot(a_ref[...], z_ref[...],
                            preferred_element_type=jnp.float32)

    @pl.when(k == pl.num_programs(1) - 1)
    def _():
        h = jnp.dot(acc_ref[...].astype(wl_ref.dtype), wl_ref[...],
                    preferred_element_type=jnp.float32)
        h = h + jnp.dot(xs_ref[...], wr_ref[...],
                        preferred_element_type=jnp.float32)
        h = h + b_ref[...]
        out_ref[...] = jnp.maximum(h, 0.0).astype(out_ref.dtype)


def _sage_layer_pre_kernel(a_ref, z_ref, xs_ref, wr_ref, b_ref,
                           out_ref, acc_ref):
    """SAGEConv (wide-input ordering, z = x @ Wl precomputed): no dead Wl DMA."""
    k = pl.program_id(1)

    @pl.when(k == 0)
    def _():
        acc_ref[...] = jnp.zeros_like(acc_ref)

    acc_ref[...] += jnp.dot(a_ref[...], z_ref[...],
                            preferred_element_type=jnp.float32)

    @pl.when(k == pl.num_programs(1) - 1)
    def _():
        h = acc_ref[...] + jnp.dot(xs_ref[...], wr_ref[...],
                                   preferred_element_type=jnp.float32)
        h = h + b_ref[...]
        out_ref[...] = jnp.maximum(h, 0.0).astype(out_ref.dtype)


def _sage_layer2_head_kernel(a_ref, z_ref, h1_ref, wl_ref, wr_ref, b_ref,
                             wa_ref, wb_ref, blin_ref, out_ref, acc_ref):
    """Layer-2 SAGEConv fused with the linear head + log_softmax.

    acc += A @ h1 over the neighbor tiles; on the last tile:
      h2     = relu(acc @ W2l + h1 @ W2r + b2)          (never written to HBM)
      logits = h1 @ Wa + h2 @ Wb + blin                 (concat-free head)
      out    = log_softmax(logits)                      (padded classes ~ -1e30)
    """
    k = pl.program_id(1)

    @pl.when(k == 0)
    def _():
        acc_ref[...] = jnp.zeros_like(acc_ref)

    acc_ref[...] += jnp.dot(a_ref[...], z_ref[...],
                            preferred_element_type=jnp.float32)

    @pl.when(k == pl.num_programs(1) - 1)
    def _():
        h1 = h1_ref[...]
        h2 = jnp.dot(acc_ref[...].astype(wl_ref.dtype), wl_ref[...],
                     preferred_element_type=jnp.float32)
        h2 = h2 + jnp.dot(h1, wr_ref[...], preferred_element_type=jnp.float32)
        h2 = jnp.maximum(h2 + b_ref[...], 0.0)
        logits = jnp.dot(h1, wa_ref[...], preferred_element_type=jnp.float32)
        logits = logits + jnp.dot(h2.astype(wb_ref.dtype), wb_ref[...],
                                  preferred_element_type=jnp.float32)
        logits = logits + blin_ref[...]        # padded classes carry -1e30 bias
        m = jnp.max(logits, axis=-1, keepdims=True)
        s = logits - m
        lse = jnp.log(jnp.sum(jnp.exp(s), axis=-1, keepdims=True))
        out_ref[...] = s - lse


def _premul_kernel(x_ref, w_ref, o_ref, acc_ref):
    """o = x @ w with a tiled reduction over the feature dim (wide-input path)."""
    k = pl.program_id(1)

    @pl.when(k == 0)
    def _():
        acc_ref[...] = jnp.zeros_like(acc_ref)

    acc_ref[...] += jnp.dot(x_ref[...], w_ref[...],
                            preferred_element_type=jnp.float32)

    @pl.when(k == pl.num_programs(1) - 1)
    def _():
        o_ref[...] = acc_ref[...].astype(o_ref.dtype)


# ------------------------------- wrapper --------------------------------------
def _round_up(v, m):
    return (v + m - 1) // m * m


def _pad2(a, rows, cols):
    return jnp.pad(a, ((0, rows - a.shape[0]), (0, cols - a.shape[1])))


def sage_forward(x, adj_norm, params):
    n, f = x.shape
    h = params["w1l"].shape[1]
    c = params["wlin"].shape[1]

    fp = _round_up(f, 128)
    hp = _round_up(h, 128)
    cp = _round_up(c, 128)

    # Neighbor (reduction) tile is fixed at 512; pad the node dim up to it so
    # tiles never degrade to 128-wide (big measured roofline hit). The row tile
    # is the largest power-of-two <= 1024 that still leaves >= 2 row tiles so
    # both v7x TensorCores get work on the "parallel" axis.
    tk = 512
    np_ = _round_up(n, tk)
    tm = 128
    for cand in (1024, 512, 256, 128):
        if np_ % cand == 0 and np_ // cand >= 2:
            tm = cand
            break

    bf16 = jnp.bfloat16
    a_p = _pad2(adj_norm, np_, np_).astype(bf16)
    x_p = _pad2(x, np_, fp).astype(bf16)

    w1l = _pad2(params["w1l"], fp, hp).astype(bf16)
    w1r = _pad2(params["w1r"], fp, hp).astype(bf16)
    b1 = _pad2(params["b1"], 1, hp).astype(jnp.float32)
    w2l = _pad2(params["w2l"], hp, hp).astype(bf16)
    w2r = _pad2(params["w2r"], hp, hp).astype(bf16)
    b2 = _pad2(params["b2"], 1, hp).astype(jnp.float32)

    # split wlin (concat elimination): first H rows act on h1, last H on h2
    wa = _pad2(params["wlin"][:h], hp, cp).astype(bf16)
    wb = _pad2(params["wlin"][h:], hp, cp).astype(bf16)
    blin = jnp.full((1, cp), -1e30, jnp.float32)
    blin = blin.at[0, :c].set(params["blin"][0].astype(jnp.float32))

    # <= ~48 MiB keeps us safe on v7x's 64 MiB/TC; actual usage is single-digit MiB.
    vmem_limit = 48 * 1024 * 1024
    cp_reduce = pltpu.CompilerParams(
        dimension_semantics=("parallel", "arbitrary"),
        vmem_limit_bytes=vmem_limit)

    grid = (np_ // tm, np_ // tk)

    # ---- layer 1 (FLOP-ordering switch: pre-multiply by W1l when Fin > H) ----
    if fp > hp:
        tf = 512 if fp % 512 == 0 else (256 if fp % 256 == 0 else 128)
        z1 = pl.pallas_call(
            _premul_kernel,
            out_shape=jax.ShapeDtypeStruct((np_, hp), bf16),
            grid=(np_ // tm, fp // tf),
            in_specs=[pl.BlockSpec((tm, tf), lambda i, k: (i, k)),
                      pl.BlockSpec((tf, hp), lambda i, k: (k, 0))],
            out_specs=pl.BlockSpec((tm, hp), lambda i, k: (i, 0)),
            scratch_shapes=[pltpu.VMEM((tm, hp), jnp.float32)],
            compiler_params=cp_reduce,
        )(x_p, w1l)
        h1 = pl.pallas_call(
            _sage_layer_pre_kernel,
            out_shape=jax.ShapeDtypeStruct((np_, hp), bf16),
            grid=grid,
            in_specs=[
                pl.BlockSpec((tm, tk), lambda i, k: (i, k)),      # A tile
                pl.BlockSpec((tk, hp), lambda i, k: (k, 0)),      # (x @ W1l) neighbors
                pl.BlockSpec((tm, fp), lambda i, k: (i, 0)),      # x self
                pl.BlockSpec((fp, hp), lambda i, k: (0, 0)),      # W1r
                pl.BlockSpec((1, hp), lambda i, k: (0, 0)),       # b1
            ],
            out_specs=pl.BlockSpec((tm, hp), lambda i, k: (i, 0)),
            scratch_shapes=[pltpu.VMEM((tm, hp), jnp.float32)],
            compiler_params=cp_reduce,
        )(a_p, z1, x_p, w1r, b1)
    else:
        h1 = pl.pallas_call(
            _sage_layer_kernel,
            out_shape=jax.ShapeDtypeStruct((np_, hp), bf16),
            grid=grid,
            in_specs=[
                pl.BlockSpec((tm, tk), lambda i, k: (i, k)),      # A tile
                pl.BlockSpec((tk, fp), lambda i, k: (k, 0)),      # x neighbors
                pl.BlockSpec((tm, fp), lambda i, k: (i, 0)),      # x self
                pl.BlockSpec((fp, hp), lambda i, k: (0, 0)),      # W1l
                pl.BlockSpec((fp, hp), lambda i, k: (0, 0)),      # W1r
                pl.BlockSpec((1, hp), lambda i, k: (0, 0)),       # b1
            ],
            out_specs=pl.BlockSpec((tm, hp), lambda i, k: (i, 0)),
            scratch_shapes=[pltpu.VMEM((tm, fp), jnp.float32)],
            compiler_params=cp_reduce,
        )(a_p, x_p, x_p, w1l, w1r, b1)

    # ---- layer 2 fused with the head: h2 never hits HBM ----
    out_p = pl.pallas_call(
        _sage_layer2_head_kernel,
        out_shape=jax.ShapeDtypeStruct((np_, cp), jnp.float32),
        grid=grid,
        in_specs=[
            pl.BlockSpec((tm, tk), lambda i, k: (i, k)),          # A tile
            pl.BlockSpec((tk, hp), lambda i, k: (k, 0)),          # h1 neighbors
            pl.BlockSpec((tm, hp), lambda i, k: (i, 0)),          # h1 self (+ head input)
            pl.BlockSpec((hp, hp), lambda i, k: (0, 0)),          # W2l
            pl.BlockSpec((hp, hp), lambda i, k: (0, 0)),          # W2r
            pl.BlockSpec((1, hp), lambda i, k: (0, 0)),           # b2
            pl.BlockSpec((hp, cp), lambda i, k: (0, 0)),          # Wa (h1 half of wlin)
            pl.BlockSpec((hp, cp), lambda i, k: (0, 0)),          # Wb (h2 half of wlin)
            pl.BlockSpec((1, cp), lambda i, k: (0, 0)),           # blin (-1e30 on pads)
        ],
        out_specs=pl.BlockSpec((tm, cp), lambda i, k: (i, 0)),
        scratch_shapes=[pltpu.VMEM((tm, hp), jnp.float32)],
        compiler_params=cp_reduce,
    )(a_p, h1, h1, w2l, w2r, b2, wa, wb, blin)

    return out_p[:n, :c]


# ------------------------------ glue (JAX) ------------------------------------
def build_norm_adj(edge_index, edge_weight, num_nodes):
    """Dense row-normalized adjacency: mean aggregation of source -> target."""
    src, dst = edge_index[0], edge_index[1]
    if edge_weight is None:
        edge_weight = jnp.ones(src.shape[0], dtype=jnp.float32)
    a = jnp.zeros((num_nodes, num_nodes), jnp.float32).at[dst, src].add(edge_weight)
    deg = a.sum(axis=1, keepdims=True)
    return a / jnp.where(deg > 0, deg, 1.0)


def init_params(key, nfeat, nhid, nclass, nlayer=2):
    ks = jax.random.split(key, 8)
    scale = 0.1
    return {
        "w1l":  scale * jax.random.normal(ks[0], (nfeat, nhid), jnp.float32),
        "w1r":  scale * jax.random.normal(ks[1], (nfeat, nhid), jnp.float32),
        "b1":   scale * jax.random.normal(ks[2], (1, nhid), jnp.float32),
        "w2l":  scale * jax.random.normal(ks[3], (nhid, nhid), jnp.float32),
        "w2r":  scale * jax.random.normal(ks[4], (nhid, nhid), jnp.float32),
        "b2":   scale * jax.random.normal(ks[5], (1, nhid), jnp.float32),
        "wlin": scale * jax.random.normal(ks[6], (nhid * nlayer, nclass), jnp.float32),
        "blin": scale * jax.random.normal(ks[7], (1, nclass), jnp.float32),
    }


def sage_reference(x, a, p):
    """Pure-JAX fp32 reference (same math as the PyTorch module, inference)."""
    h1 = jax.nn.relu(a @ x @ p["w1l"] + x @ p["w1r"] + p["b1"])
    h2 = jax.nn.relu(a @ h1 @ p["w2l"] + h1 @ p["w2r"] + p["b2"])
    logits = jnp.concatenate([h1, h2], axis=-1) @ p["wlin"] + p["blin"]
    return jax.nn.log_softmax(logits, axis=1)


if __name__ == "__main__":
    N, NFEAT, NHID, NCLASS = 16, 8, 32, 4

    key = jax.random.PRNGKey(0)
    kx, ke, kw, kp = jax.random.split(key, 4)

    # node features
    x = jax.random.normal(kx, (N, NFEAT), jnp.float32)

    # deterministic random graph: 48 directed edges + self loops
    src = jax.random.randint(ke, (48,), 0, N)
    dst = jax.random.randint(jax.random.fold_in(ke, 1), (48,), 0, N)
    loops = jnp.arange(N)
    edge_index = jnp.stack([jnp.concatenate([src, loops]),
                            jnp.concatenate([dst, loops])], axis=0)
    edge_weight = jax.random.uniform(kw, (edge_index.shape[1],), jnp.float32,
                                     minval=0.5, maxval=1.5)

    adj_norm = build_norm_adj(edge_index, edge_weight, N)
    params = init_params(kp, NFEAT, NHID, NCLASS)

    out = sage_forward(x, adj_norm, params)
    out = jax.block_until_ready(out)

    assert out.shape == (N, NCLASS)
    # rows of log_softmax should (log-)sum to ~0
    assert jnp.allclose(jnp.sum(jnp.exp(out), axis=1), 1.0, atol=1e-4)
    # bf16 MXU inputs vs fp32 reference: loose tolerance
    ref = sage_reference(x, adj_norm, params)
    assert jnp.max(jnp.abs(out - ref)) < 0.1

    print("KERNEL_OK")
</pallas_src>

<mosaic_0001>
module attributes {stable_mosaic.version = 11 : i64} {
  func.func @_sage_layer_kernel(%arg0: i32, %arg1: i32, %arg2: memref<256x512xbf16, #tpu.memory_space<vmem>>, %arg3: memref<512x128xbf16, #tpu.memory_space<vmem>>, %arg4: memref<256x128xbf16, #tpu.memory_space<vmem>>, %arg5: memref<128x128xbf16, #tpu.memory_space<vmem>>, %arg6: memref<128x128xbf16, #tpu.memory_space<vmem>>, %arg7: memref<1x128xf32, #tpu.memory_space<vmem>>, %arg8: memref<256x128xbf16, #tpu.memory_space<vmem>>, %arg9: memref<256x128xf32, #tpu.memory_space<vmem>>) attributes {dimension_semantics = [#tpu.dimension_semantics<parallel>, #tpu.dimension_semantics<arbitrary>], iteration_bounds = array<i64: 2, 1>, scalar_prefetch = 0 : i64, scratch_operands = 1 : i64, tpu.core_type = #tpu.core_type<tc>, window_params = [{transform_indices = @transform_0, window_bounds = array<i64: 256, 512>}, {transform_indices = @transform_1, window_bounds = array<i64: 512, 128>}, {transform_indices = @transform_2, window_bounds = array<i64: 256, 128>}, {pipeline_mode = #tpu.pipeline_mode<synchronous>, transform_indices = @transform_3, window_bounds = array<i64: 128, 128>}, {pipeline_mode = #tpu.pipeline_mode<synchronous>, transform_indices = @transform_4, window_bounds = array<i64: 128, 128>}, {pipeline_mode = #tpu.pipeline_mode<synchronous>, transform_indices = @transform_5, window_bounds = array<i64: 1, 128>}, {transform_indices = @transform_6, window_bounds = array<i64: 256, 128>}]} {
    %c0_i32 = arith.constant 0 : i32
    %0 = arith.cmpi eq, %arg1, %c0_i32 : i32
    %1 = arith.extui %0 : i1 to i32
    %c0_i32_0 = arith.constant 0 : i32
    %2 = arith.cmpi ne, %1, %c0_i32_0 : i32
    scf.if %2 {
      %cst_10 = arith.constant 0.000000e+00 : f32
      %12 = vector.broadcast %cst_10 : f32 to vector<256x128xf32>
      %c0_11 = arith.constant 0 : index
      %c0_12 = arith.constant 0 : index
      %13 = vector.load %arg9[%c0_11, %c0_12] : memref<256x128xf32, #tpu.memory_space<vmem>>, vector<256x128xf32>
      tpu.vector_store %arg9[%c0_11, %c0_12], %12 {strides = array<i32>} : memref<256x128xf32, #tpu.memory_space<vmem>>, vector<256x128xf32>,
    } else {
    }
    %c0 = arith.constant 0 : index
    %c0_1 = arith.constant 0 : index
    %3 = vector.load %arg9[%c0, %c0_1] : memref<256x128xf32, #tpu.memory_space<vmem>>, vector<256x128xf32>
    %c0_2 = arith.constant 0 : index
    %c0_3 = arith.constant 0 : index
    %4 = vector.load %arg2[%c0_2, %c0_3] : memref<256x512xbf16, #tpu.memory_space<vmem>>, vector<256x512xbf16>
    %c0_4 = arith.constant 0 : index
    %c0_5 = arith.constant 0 : index
    %5 = vector.load %arg3[%c0_4, %c0_5] : memref<512x128xbf16, #tpu.memory_space<vmem>>, vector<512x128xbf16>
    %cst = arith.constant dense<0.000000e+00> : vector<256x128xf32>
    %6 = tpu.matmul %4, %5, %cst {dimension_numbers = #tpu.dot_dimension_numbers<[1], [0], [0], [1], [0, 0, 1, 1], [], []>} : vector<256x512xbf16>, vector<512x128xbf16>, vector<256x128xf32> -> vector<256x128xf32>
    %7 = arith.addf %3, %6 : vector<256x128xf32>
    %c0_6 = arith.constant 0 : index
    %c0_7 = arith.constant 0 : index
    %8 = vector.load %arg9[%c0_6, %c0_7] : memref<256x128xf32, #tpu.memory_space<vmem>>, vector<256x128xf32>
    tpu.vector_store %arg9[%c0_6, %c0_7], %7 {strides = array<i32>} : memref<256x128xf32, #tpu.memory_space<vmem>>, vector<256x128xf32>,
    %c0_i32_8 = arith.constant 0 : i32
    %9 = arith.cmpi eq, %arg1, %c0_i32_8 : i32
    %10 = arith.extui %9 : i1 to i32
    %c0_i32_9 = arith.constant 0 : i32
    %11 = arith.cmpi ne, %10, %c0_i32_9 : i32
    scf.if %11 {
      %c0_10 = arith.constant 0 : index
      %c0_11 = arith.constant 0 : index
      %12 = vector.load %arg9[%c0_10, %c0_11] : memref<256x128xf32, #tpu.memory_space<vmem>>, vector<256x128xf32>
      %13 = arith.truncf %12 : vector<256x128xf32> to vector<256x128xbf16>
      %c0_12 = arith.constant 0 : index
      %c0_13 = arith.constant 0 : index
      %14 = vector.load %arg5[%c0_12, %c0_13] : memref<128x128xbf16, #tpu.memory_space<vmem>>, vector<128x128xbf16>
      %cst_14 = arith.constant dense<0.000000e+00> : vector<256x128xf32>
      %15 = tpu.matmul %13, %14, %cst_14 {dimension_numbers = #tpu.dot_dimension_numbers<[1], [0], [0], [1], [0, 0, 1, 1], [], []>} : vector<256x128xbf16>, vector<128x128xbf16>, vector<256x128xf32> -> vector<256x128xf32>
      %c0_15 = arith.constant 0 : index
      %c0_16 = arith.constant 0 : index
      %16 = vector.load %arg4[%c0_15, %c0_16] : memref<256x128xbf16, #tpu.memory_space<vmem>>, vector<256x128xbf16>
      %c0_17 = arith.constant 0 : index
      %c0_18 = arith.constant 0 : index
      %17 = vector.load %arg6[%c0_17, %c0_18] : memref<128x128xbf16, #tpu.memory_space<vmem>>, vector<128x128xbf16>
      %cst_19 = arith.constant dense<0.000000e+00> : vector<256x128xf32>
      %18 = tpu.matmul %16, %17, %cst_19 {dimension_numbers = #tpu.dot_dimension_numbers<[1], [0], [0], [1], [0, 0, 1, 1], [], []>} : vector<256x128xbf16>, vector<128x128xbf16>, vector<256x128xf32> -> vector<256x128xf32>
      %19 = arith.addf %15, %18 : vector<256x128xf32>
      %c0_20 = arith.constant 0 : index
      %c0_21 = arith.constant 0 : index
      %20 = vector.load %arg7[%c0_20, %c0_21] : memref<1x128xf32, #tpu.memory_space<vmem>>, vector<1x128xf32>
      %21 = vector.broadcast %20 : vector<1x128xf32> to vector<256x128xf32>
      %22 = arith.addf %19, %21 : vector<256x128xf32>
      %cst_22 = arith.constant 0.000000e+00 : f32
      %23 = vector.broadcast %cst_22 : f32 to vector<256x128xf32>
      %24 = arith.maximumf %22, %23 : vector<256x128xf32>
      %25 = arith.truncf %24 : vector<256x128xf32> to vector<256x128xbf16>
      %c0_23 = arith.constant 0 : index
      %c0_24 = arith.constant 0 : index
      %26 = vector.load %arg8[%c0_23, %c0_24] : memref<256x128xbf16, #tpu.memory_space<vmem>>, vector<256x128xbf16>
      tpu.vector_store %arg8[%c0_23, %c0_24], %25 {strides = array<i32>} : memref<256x128xbf16, #tpu.memory_space<vmem>>, vector<256x128xbf16>,
    } else {
    }
    return
  }
  func.func @transform_0(%arg0: i32, %arg1: i32) -> (i32, i32) {
    %c0_i32 = arith.constant 0 : i32
    return %arg0, %arg1 : i32, i32
  }
  func.func @transform_1(%arg0: i32, %arg1: i32) -> (i32, i32) {
    %c0_i32 = arith.constant 0 : i32
    %c0_i32_0 = arith.constant 0 : i32
    return %arg1, %c0_i32 : i32, i32
  }
  func.func @transform_2(%arg0: i32, %arg1: i32) -> (i32, i32) {
    %c0_i32 = arith.constant 0 : i32
    %c0_i32_0 = arith.constant 0 : i32
    return %arg0, %c0_i32 : i32, i32
  }
  func.func @transform_3(%arg0: i32, %arg1: i32) -> (i32, i32) {
    %c0_i32 = arith.constant 0 : i32
    %c0_i32_0 = arith.constant 0 : i32
    %c0_i32_1 = arith.constant 0 : i32
    return %c0_i32, %c0_i32_0 : i32, i32
  }
  func.func @transform_4(%arg0: i32, %arg1: i32) -> (i32, i32) {
    %c0_i32 = arith.constant 0 : i32
    %c0_i32_0 = arith.constant 0 : i32
    %c0_i32_1 = arith.constant 0 : i32
    return %c0_i32, %c0_i32_0 : i32, i32
  }
  func.func @transform_5(%arg0: i32, %arg1: i32) -> (i32, i32) {
    %c0_i32 = arith.constant 0 : i32
    %c0_i32_0 = arith.constant 0 : i32
    %c0_i32_1 = arith.constant 0 : i32
    return %c0_i32, %c0_i32_0 : i32, i32
  }
  func.func @transform_6(%arg0: i32, %arg1: i32) -> (i32, i32) {
    %c0_i32 = arith.constant 0 : i32
    %c0_i32_0 = arith.constant 0 : i32
    return %arg0, %c0_i32 : i32, i32
  }
}

</mosaic_0001>

<llo_original>
// kernel: tpu_custom_call.1
$region0: #{tpu_custom_call.1}
  #allocation0 [shape = 'u32[]', space=smem, size = 0x4, offset = 0x4, fixed_abs, tag = 'smem constant byte address 0x4 - core index']
  #allocation1 [shape = 'u32[72,128]{1,0:T(1,128)}', space=vmem, size = 0x9000, scoped, tag = 'internal scratch']
  #allocation2 [shape = 'f32[256,128]{1,0:T(8,128)}', space=vmem, size = 0x20000, scoped, tag = 'scratch operand']
  %s0 = inlined_call_operand.hbm [shape: bf16[512,512], index: 0, kind: input, shape index: {}]
  %s1 = inlined_call_operand.hbm [shape: bf16[512,128], index: 1, kind: input, shape index: {}]
  %s2 = inlined_call_operand.hbm [shape: bf16[512,128], index: 2, kind: input, shape index: {}]
  %s3 = inlined_call_operand.hbm [shape: bf16[128,128], index: 3, kind: input, shape index: {}]
  %s4 = inlined_call_operand.hbm [shape: bf16[128,128], index: 4, kind: input, shape index: {}]
  %s5 = inlined_call_operand.vmem [shape: f32[1,128], index: 5, kind: input, shape index: {}]
  %s6 = inlined_call_operand.hbm [shape: bf16[512,128], index: 6, kind: output, shape index: {}]
  %s7 = sld [smem:[#allocation0]]
  $region85: #{tpu_custom_call.1} parent=0
    _
  %s9 = ssub.s32 1, %s7
  %s10 = scalar_select 0, %s9, %s7
  $region1: #{tpu_custom_call.1} parent=0
    #allocation3 [shape = 'u8[524288]{0}', space=vmem, size = 0x80000, scoped, tag = 'input window, operand 0']
    #allocation4 [shape = 's32[2]{0}', space=sflag, size = 0x8, scoped, tag = 'scoped memory for tpu_custom_call.1']
    #allocation5 [shape = 's32[2]{0}', space=sflag, size = 0x8, scoped, tag = 'scoped memory for tpu_custom_call.1']
    #allocation6 [shape = 'u8[131072]{0}', space=vmem, size = 0x20000, scoped, tag = 'input window, operand 1, single buffered']
    #allocation7 [shape = 's32[1]{0}', space=sflag, size = 0x4, scoped, tag = 'scoped memory for tpu_custom_call.1']
    #allocation8 [shape = 'u8[131072]{0}', space=vmem, size = 0x20000, scoped, tag = 'input window, operand 2']
    #allocation9 [shape = 'u8[32768]{0}', space=vmem, size = 0x8000, scoped, tag = 'input window, operand 3, single buffered']
    #allocation10 [shape = 'u8[32768]{0}', space=vmem, size = 0x8000, scoped, tag = 'input window, operand 4, single buffered']
    #allocation11 [shape = 's32[1]{0}', space=sflag, size = 0x4, scoped, tag = 'scoped memory for tpu_custom_call.1']
    #allocation12 [shape = 'u8[131072]{0}', space=vmem, size = 0x20000, scoped, tag = 'output window, operand 0']
    %11 = vsyncpa [#allocation4], 0
    %s12 = scalar_lea.sflag [#allocation4], 1
    %13 = vsyncpa %s12, 0
    %14 = vsyncpa [#allocation7], 0
    %15 = vsyncpa [#allocation11], 0
    %16 = vsyncpa [#allocation5], 0
    %s17 = scalar_lea.sflag [#allocation5], 1
    %18 = vsyncpa %s17, 0
    loop: start=0, step=1, limit=4
    $region2: #{tpu_custom_call.1} parent=1 // loop_pre_header
      _
    $region3: #{tpu_custom_call.1} parent=1 // loop_header
      %s20 = sphi 0, %s24
      %p21 = scmp.ge.s32.totalorder %s20, 4
      %s27 = sphi 0, %s39
      %s28 = sphi 0, %s35
      %s29 = sphi 0, %s27
      %s30 = sphi 0, %s28
      %s31 = sphi 0, %s29
      %s32 = sphi 0, %s30
      %s44 = sphi 0, %s46
      %s47 = sphi 0, %s44
      %s48 = sphi 0, %s47
      %s64 = sphi 0, %s48
      %s70 = sphi 0, %s72
      %s73 = sphi 0, %s70
      %s74 = sphi 0, %s73
      %s90 = sphi 0, %s74
      %s96 = sphi 0, %s98
      %s99 = sphi 0, %s96
      %s100 = sphi 0, %s99
      %s116 = sphi 0, %s100
      %s120 = sphi 0, %s120
      %s122 = sphi 0, %s120
      %s123 = sphi 0, %s122
      %s137 = sphi 0, %s123
      %s141 = sphi 0, %s141
      %s143 = sphi 0, %s141
      %s144 = sphi 0, %s143
      %s158 = sphi 0, %s144
      %s162 = sphi 0, %s162
      %s164 = sphi 0, %s162
      %s165 = sphi 0, %s164
      %s179 = sphi 0, %s165
      %s185 = sphi 0, %s187
      %s188 = sphi 0, %s185
      %s189 = sphi 0, %s188
      %s205 = sphi 0, %s189
    $region4: #{tpu_custom_call.1} parent=1 // loop_header_branch
      %23 = sbr.rel (%p21) target = $region8
    $region5: #{tpu_custom_call.1} parent=1 // loop_body
      %s25 = ssub.s32 %s20, 1
      %s26 = ssub.s32 %s20, 2
      %s33 = sadd.s32 1, %s28
      %p34 = scmp.ge.s32.totalorder %s33, 1
      %s35 = scalar_select %p34, 0, %s33
      %s36 = sadd.s32 1, %s27
      %s37 = scalar_select %p34, %s36, %s27
      %p38 = scmp.ge.s32.totalorder %s37, 2
      %s39 = scalar_select %p38, 0, %s37
      %s40 = ssub.s32 %s27, %s39
      %s41 = ssub.s32 %s28, %s35
      %s42 = sor.u32 %s40, %s41
      %p43 = scmp.eq.s32.totalorder %s42, 0
      %s45 = sadd.s32 %s44, 1
      %s46 = scalar_select %p43, %s44, %s45
      %p49 = pneg %p43
      %p50 = scmp.eq.s32.totalorder %s20, 1
      %p51 = por %p49, %p50
      %p52 = scmp.ne.s32.totalorder %s44, %s47
      %p53 = scmp.eq.s32.totalorder %s20, 0
      %p54 = por %p52, %p53
      %p55 = scmp.ne.s32.totalorder %s44, %s47
      %p56 = scmp.eq.s32.totalorder %s25, 1
      %p57 = por %p55, %p56
      %p58 = scmp.ne.s32.totalorder %s47, %s48
      %p59 = scmp.eq.s32.totalorder %s25, 0
      %p60 = por %p58, %p59
      %p61 = scmp.ne.s32.totalorder %s47, %s48
      %p62 = scmp.eq.s32.totalorder %s26, 1
      %p63 = por %p61, %p62
      %p65 = scmp.ne.s32.totalorder %s48, %s64
      %p66 = scmp.eq.s32.totalorder %s26, 0
      %p67 = por %p65, %p66
      %s68 = ssub.s32 %s28, %s35
      %p69 = scmp.eq.s32.totalorder %s68, 0
      %s71 = sadd.s32 %s70, 1
      %s72 = scalar_select %p69, %s70, %s71
      %p75 = pneg %p69
      %p76 = scmp.eq.s32.totalorder %s20, 1
      %p77 = por %p75, %p76
      %p78 = scmp.ne.s32.totalorder %s70, %s73
      %p79 = scmp.eq.s32.totalorder %s20, 0
      %p80 = por %p78, %p79
      %p81 = scmp.ne.s32.totalorder %s70, %s73
      %p82 = scmp.eq.s32.totalorder %s25, 1
      %p83 = por %p81, %p82
      %p84 = scmp.ne.s32.totalorder %s73, %s74
      %p85 = scmp.eq.s32.totalorder %s25, 0
      %p86 = por %p84, %p85
      %p87 = scmp.ne.s32.totalorder %s73, %s74
      %p88 = scmp.eq.s32.totalorder %s26, 1
      %p89 = por %p87, %p88
      %p91 = scmp.ne.s32.totalorder %s74, %s90
      %p92 = scmp.eq.s32.totalorder %s26, 0
      %p93 = por %p91, %p92
      %s94 = ssub.s32 %s27, %s39
      %p95 = scmp.eq.s32.totalorder %s94, 0
      %s97 = sadd.s32 %s96, 1
      %s98 = scalar_select %p95, %s96, %s97
      %p101 = pneg %p95
      %p102 = scmp.eq.s32.totalorder %s20, 1
      %p103 = por %p101, %p102
      %p104 = scmp.ne.s32.totalorder %s96, %s99
      %p105 = scmp.eq.s32.totalorder %s20, 0
      %p106 = por %p104, %p105
      %p107 = scmp.ne.s32.totalorder %s96, %s99
      %p108 = scmp.eq.s32.totalorder %s25, 1
      %p109 = por %p107, %p108
      %p110 = scmp.ne.s32.totalorder %s99, %s100
      %p111 = scmp.eq.s32.totalorder %s25, 0
      %p112 = por %p110, %p111
      %p113 = scmp.ne.s32.totalorder %s99, %s100
      %p114 = scmp.eq.s32.totalorder %s26, 1
      %p115 = por %p113, %p114
      %p117 = scmp.ne.s32.totalorder %s100, %s116
      %p118 = scmp.eq.s32.totalorder %s26, 0
      %p119 = por %p117, %p118
      %s121 = sadd.s32 %s120, 1
      %p124 = scmp.eq.s32.totalorder %s20, 1
      %p125 = scmp.ne.s32.totalorder %s120, %s122
      %p126 = scmp.eq.s32.totalorder %s20, 0
      %p127 = por %p125, %p126
      %p128 = scmp.ne.s32.totalorder %s120, %s122
      %p129 = scmp.eq.s32.totalorder %s25, 1
      %p130 = por %p128, %p129
      %p131 = scmp.ne.s32.totalorder %s122, %s123
      %p132 = scmp.eq.s32.totalorder %s25, 0
      %p133 = por %p131, %p132
      %p134 = scmp.ne.s32.totalorder %s122, %s123
      %p135 = scmp.eq.s32.totalorder %s26, 1
      %p136 = por %p134, %p135
      %p138 = scmp.ne.s32.totalorder %s123, %s137
      %p139 = scmp.eq.s32.totalorder %s26, 0
      %p140 = por %p138, %p139
      %s142 = sadd.s32 %s141, 1
      %p145 = scmp.eq.s32.totalorder %s20, 1
      %p146 = scmp.ne.s32.totalorder %s141, %s143
      %p147 = scmp.eq.s32.totalorder %s20, 0
      %p148 = por %p146, %p147
      %p149 = scmp.ne.s32.totalorder %s141, %s143
      %p150 = scmp.eq.s32.totalorder %s25, 1
      %p151 = por %p149, %p150
      %p152 = scmp.ne.s32.totalorder %s143, %s144
      %p153 = scmp.eq.s32.totalorder %s25, 0
      %p154 = por %p152, %p153
      %p155 = scmp.ne.s32.totalorder %s143, %s144
      %p156 = scmp.eq.s32.totalorder %s26, 1
      %p157 = por %p155, %p156
      %p159 = scmp.ne.s32.totalorder %s144, %s158
      %p160 = scmp.eq.s32.totalorder %s26, 0
      %p161 = por %p159, %p160
      %s163 = sadd.s32 %s162, 1
      %p166 = scmp.eq.s32.totalorder %s20, 1
      %p167 = scmp.ne.s32.totalorder %s162, %s164
      %p168 = scmp.eq.s32.totalorder %s20, 0
      %p169 = por %p167, %p168
      %p170 = scmp.ne.s32.totalorder %s162, %s164
      %p171 = scmp.eq.s32.totalorder %s25, 1
      %p172 = por %p170, %p171
      %p173 = scmp.ne.s32.totalorder %s164, %s165
      %p174 = scmp.eq.s32.totalorder %s25, 0
      %p175 = por %p173, %p174
      %p176 = scmp.ne.s32.totalorder %s164, %s165
      %p177 = scmp.eq.s32.totalorder %s26, 1
      %p178 = por %p176, %p177
      %p180 = scmp.ne.s32.totalorder %s165, %s179
      %p181 = scmp.eq.s32.totalorder %s26, 0
      %p182 = por %p180, %p181
      %s183 = ssub.s32 %s27, %s39
      %p184 = scmp.eq.s32.totalorder %s183, 0
      %s186 = sadd.s32 %s185, 1
      %s187 = scalar_select %p184, %s185, %s186
      %p190 = pneg %p184
      %p191 = scmp.eq.s32.totalorder %s20, 1
      %p192 = por %p190, %p191
      %p193 = scmp.ne.s32.totalorder %s185, %s188
      %p194 = scmp.eq.s32.totalorder %s20, 0
      %p195 = por %p193, %p194
      %p196 = scmp.ne.s32.totalorder %s185, %s188
      %p197 = scmp.eq.s32.totalorder %s25, 1
      %p198 = por %p196, %p197
      %p199 = scmp.ne.s32.totalorder %s188, %s189
      %p200 = scmp.eq.s32.totalorder %s25, 0
      %p201 = por %p199, %p200
      %p202 = scmp.ne.s32.totalorder %s188, %s189
      %p203 = scmp.eq.s32.totalorder %s26, 1
      %p204 = por %p202, %p203
      %p206 = scmp.ne.s32.totalorder %s189, %s205
      %p207 = scmp.eq.s32.totalorder %s26, 0
      %p208 = por %p206, %p207
      %p209 = scmp.le.s32.totalorder 1, %s20
      %p210 = scmp.lt.s32.totalorder %s20, 3
      %p211 = pnand %p209, %p210
      %p212 = pneg %p211
      // Predicated region
      $region9: #{tpu_custom_call.1} parent=5 // pred_check
        _
      $region10: #{tpu_custom_call.1} parent=5 // pred_check_branch
        %214 = sbr.rel (%p211) target = $region12
      $region11: #{tpu_custom_call.1} parent=5 // pred_region
        %s215 = ssub.s32 %s20, 1
        // Predicated region
        $region13: #{tpu_custom_call.1} parent=11 // pred_check
          %p216 = pneg %p86
        $region14: #{tpu_custom_call.1} parent=11 // pred_check_branch
          %218 = sbr.rel (%p216) target = $region16
        $region15: #{tpu_custom_call.1} parent=11 // pred_region
          %s219 = smul.u32 64, %s30
          %221 = vsyncadd [#allocation7], 0
          %s222 = smul.addr %s219, 4
          %s223 = scalar_lea.hbm %s1, %s222
          %s224 = sshll.u32 %s223, 4
          %s225 = int_to_ptr.hbm [resolvable:$true] %s224
          %s226 = sshll.u32 [#allocation6], 4
          %s227 = int_to_ptr.vmem [resolvable:$true] %s226
          %232 = dma.hbm_to_vmem [thread:$0]  %s225, 4096, %s227, [#allocation7], 64, 64, 4
        $region16: #{tpu_custom_call.1} parent=11 // pred_fallthru
          _
        // Predicated region
        $region17: #{tpu_custom_call.1} parent=11 // pred_check
          %p233 = pneg %p133
        $region18: #{tpu_custom_call.1} parent=11 // pred_check_branch
          %235 = sbr.rel (%p233) target = $region20
        $region19: #{tpu_custom_call.1} parent=11 // pred_region
          %237 = vsyncadd [#allocation7], 0
          %s238 = sshll.u32 %s3, 4
          %s239 = int_to_ptr.hbm [resolvable:$true] %s238
          %s240 = sshll.u32 [#allocation9], 4
          %s241 = int_to_ptr.vmem [resolvable:$true] %s240
          %246 = dma.hbm_to_vmem [thread:$0]  %s239, 1024, %s241, [#allocation7], 64, 64, 4
        $region20: #{tpu_custom_call.1} parent=11 // pred_fallthru
          _
        // Predicated region
        $region21: #{tpu_custom_call.1} parent=11 // pred_check
          %p247 = pneg %p154
        $region22: #{tpu_custom_call.1} parent=11 // pred_check_branch
          %249 = sbr.rel (%p247) target = $region24
        $region23: #{tpu_custom_call.1} parent=11 // pred_region
          %251 = vsyncadd [#allocation11], 0
          %s252 = sshll.u32 %s4, 4
          %s253 = int_to_ptr.hbm [resolvable:$true] %s252
          %s254 = sshll.u32 [#allocation10], 4
          %s255 = int_to_ptr.vmem [resolvable:$true] %s254
          %260 = dma.hbm_to_vmem [thread:$0]  %s253, 1024, %s255, [#allocation11], 64, 64, 4
        $region24: #{tpu_custom_call.1} parent=11 // pred_fallthru
          _
        // Predicated region
        $region25: #{tpu_custom_call.1} parent=11 // pred_check
          %p261 = pneg %p175
        $region26: #{tpu_custom_call.1} parent=11 // pred_check_branch
          %263 = sbr.rel (%p261) target = $region28
        $region27: #{tpu_custom_call.1} parent=11 // pred_region
          _
        $region28: #{tpu_custom_call.1} parent=11 // pred_fallthru
          _
      $region12: #{tpu_custom_call.1} parent=5 // pred_fallthru
        _
      %p264 = scmp.lt.s32.totalorder %s20, 2
      // Predicated region
      $region29: #{tpu_custom_call.1} parent=5 // pred_check
        %p265 = pneg %p264
      $region30: #{tpu_custom_call.1} parent=5 // pred_check_branch
        %267 = sbr.rel (%p265) target = $region32
      $region31: #{tpu_custom_call.1} parent=5 // pred_region
        // Predicated region
        $region33: #{tpu_custom_call.1} parent=31 // pred_check
          %p268 = pneg %p54
        $region34: #{tpu_custom_call.1} parent=31 // pred_check_branch
          %270 = sbr.rel (%p268) target = $region36
        $region35: #{tpu_custom_call.1} parent=31 // pred_region
          %s271 = sand.u32 %s20, 1
          %s272 = scalar_lea.sflag [#allocation4], %s271
          %s273 = sand.u32 %s44, 1
          %s274 = smul.addr %s273, 512
          %s275 = scalar_lea.vmem [#allocation3], %s274
          %s276 = smul.u32 32, %s27
          %s277 = smul.u32 4, %s28
          %279 = vsyncadd %s272, 0
          %s280 = smul.addr %s276, 4
          %s281 = sadd.s32 %s277, %s280
          %s282 = smul.addr %s281, 4
          %s283 = scalar_lea.hbm %s0, %s282
          %s284 = sshll.u32 %s283, 4
          %s285 = int_to_ptr.hbm [resolvable:$true] %s284
          %s286 = sshll.u32 %s275, 4
          %s287 = int_to_ptr.vmem [resolvable:$true] %s286
          %292 = dma.hbm_to_vmem [thread:$0]  %s285, 8192, %s287, %s272, 256, 256, 16
        $region36: #{tpu_custom_call.1} parent=31 // pred_fallthru
          _
        // Predicated region
        $region37: #{tpu_custom_call.1} parent=31 // pred_check
          %p293 = pneg %p106
        $region38: #{tpu_custom_call.1} parent=31 // pred_check_branch
          %295 = sbr.rel (%p293) target = $region40
        $region39: #{tpu_custom_call.1} parent=31 // pred_region
          %s296 = sand.u32 %s20, 1
          %s297 = scalar_lea.sflag [#allocation4], %s296
          %s298 = sand.u32 %s96, 1
          %s299 = smul.addr %s298, 128
          %s300 = scalar_lea.vmem [#allocation8], %s299
          %s301 = smul.u32 32, %s27
          %303 = vsyncadd %s297, 0
          %s304 = smul.addr %s301, 4
          %s305 = scalar_lea.hbm %s2, %s304
          %s306 = sshll.u32 %s305, 4
          %s307 = int_to_ptr.hbm [resolvable:$true] %s306
          %s308 = sshll.u32 %s300, 4
          %s309 = int_to_ptr.vmem [resolvable:$true] %s308
          %314 = dma.hbm_to_vmem [thread:$0]  %s307, 2048, %s309, %s297, 64, 64, 4
        $region40: #{tpu_custom_call.1} parent=31 // pred_fallthru
          _
      $region32: #{tpu_custom_call.1} parent=5 // pred_fallthru
        _
      %p315 = scmp.le.s32.totalorder 1, %s20
      %p316 = scmp.lt.s32.totalorder %s20, 3
      %p317 = pnand %p315, %p316
      %p318 = pneg %p317
      // Predicated region
      $region41: #{tpu_custom_call.1} parent=5 // pred_check
        _
      $region42: #{tpu_custom_call.1} parent=5 // pred_check_branch
        %320 = sbr.rel (%p317) target = $region44
      $region43: #{tpu_custom_call.1} parent=5 // pred_region
        %s321 = ssub.s32 %s20, 1
        %s322 = sand.u32 %s25, 1
        %s323 = scalar_lea.sflag [#allocation4], %s322
        %s324 = sand.u32 %s47, 1
        %s325 = smul.addr %s324, 512
        %s326 = scalar_lea.vmem [#allocation3], %s325
        // Predicated region
        $region45: #{tpu_custom_call.1} parent=43 // pred_check
          %p327 = pneg %p60
        $region46: #{tpu_custom_call.1} parent=43 // pred_check_branch
          %329 = sbr.rel (%p327) target = $region48
        $region47: #{tpu_custom_call.1} parent=43 // pred_region
          %331 = dma.done %s323, 8192
        $region48: #{tpu_custom_call.1} parent=43 // pred_fallthru
          _
        // Predicated region
        $region49: #{tpu_custom_call.1} parent=43 // pred_check
          %p332 = pneg %p86
        $region50: #{tpu_custom_call.1} parent=43 // pred_check_branch
          %334 = sbr.rel (%p332) target = $region52
        $region51: #{tpu_custom_call.1} parent=43 // pred_region
          %336 = dma.done [#allocation7], 4096
        $region52: #{tpu_custom_call.1} parent=43 // pred_fallthru
          _
        %s337 = sand.u32 %s25, 1
        %s338 = scalar_lea.sflag [#allocation4], %s337
        %s339 = sand.u32 %s99, 1
        %s340 = smul.addr %s339, 128
        %s341 = scalar_lea.vmem [#allocation8], %s340
        // Predicated region
        $region53: #{tpu_custom_call.1} parent=43 // pred_check
          %p342 = pneg %p112
        $region54: #{tpu_custom_call.1} parent=43 // pred_check_branch
          %344 = sbr.rel (%p342) target = $region56
        $region55: #{tpu_custom_call.1} parent=43 // pred_region
          %346 = dma.done %s338, 2048
        $region56: #{tpu_custom_call.1} parent=43 // pred_fallthru
          _
        // Predicated region
        $region57: #{tpu_custom_call.1} parent=43 // pred_check
          %p347 = pneg %p133
        $region58: #{tpu_custom_call.1} parent=43 // pred_check_branch
          %349 = sbr.rel (%p347) target = $region60
        $region59: #{tpu_custom_call.1} parent=43 // pred_region
          %351 = dma.done [#allocation7], 1024
        $region60: #{tpu_custom_call.1} parent=43 // pred_fallthru
          _
        // Predicated region
        $region61: #{tpu_custom_call.1} parent=43 // pred_check
          %p352 = pneg %p154
        $region62: #{tpu_custom_call.1} parent=43 // pred_check_branch
          %354 = sbr.rel (%p352) target = $region64
        $region63: #{tpu_custom_call.1} parent=43 // pred_region
          %356 = dma.done [#allocation11], 1024
        $region64: #{tpu_custom_call.1} parent=43 // pred_fallthru
          _
        %s357 = sand.u32 %s25, 1
        %s358 = scalar_lea.sflag [#allocation4], %s357
        %s359 = sand.u32 %s47, 1
        %s360 = smul.addr %s359, 512
        %s361 = scalar_lea.vmem [#allocation3], %s360
        %p362 = pneg %p60
        %p363 = pneg %p57
        %p364 = pneg %p86
        %p365 = pneg %p83
        %s366 = sand.u32 %s25, 1
        %s367 = scalar_lea.sflag [#allocation4], %s366
        %s368 = sand.u32 %s99, 1
        %s369 = smul.addr %s368, 128
        %s370 = scalar_lea.vmem [#allocation8], %s369
        %p371 = pneg %p112
        %p372 = pneg %p109
        %p373 = pneg %p133
        %p374 = pneg %p130
        %p375 = pneg %p154
        %p376 = pneg %p151
        %p377 = pneg %p175
        %p378 = pneg %p172
        %p379 = pneg %p201
        %p380 = pneg %p198
        %s381 = sand.u32 %s188, 1
        %s382 = scalar_lea.sflag [#allocation5], %s381
        %s383 = sand.u32 %s188, 1
        %s384 = smul.addr %s383, 128
        %s385 = scalar_lea.vmem [#allocation12], %s384
        %s386 = smul.u32 32, %s29
        %s387 = smul.u32 4, %s30
        %s388 = smul.u32 64, %s30
        %s389 = smul.u32 32, %s29
        %s390 = smul.u32 32, %s29
        %p391 = scmp.eq.s32.totalorder %s30, 0
        // Predicated region
        $region65: #{tpu_custom_call.1} parent=43 // pred_check
          %p392 = pneg %p391
        $region66: #{tpu_custom_call.1} parent=43 // pred_check_branch
          %394 = sbr.rel (%p392) target = $region68
        $region67: #{tpu_custom_call.1} parent=43 // pred_region
          %395 = vst [vmem:[#allocation2] sm:$0xff] 0.0
          %396 = vst [vmem:[#allocation2 + $0x8] sm:$0xff] 0.0
          %397 = vst [vmem:[#allocation2 + $0x10] sm:$0xff] 0.0
          %398 = vst [vmem:[#allocation2 + $0x18] sm:$0xff] 0.0
          %399 = vst [vmem:[#allocation2 + $0x20] sm:$0xff] 0.0
          %400 = vst [vmem:[#allocation2 + $0x28] sm:$0xff] 0.0
          %401 = vst [vmem:[#allocation2 + $0x30] sm:$0xff] 0.0
          %402 = vst [vmem:[#allocation2 + $0x38] sm:$0xff] 0.0
          %403 = vst [vmem:[#allocation2 + $0x40] sm:$0xff] 0.0
          %404 = vst [vmem:[#allocation2 + $0x48] sm:$0xff] 0.0
          %405 = vst [vmem:[#allocation2 + $0x50] sm:$0xff] 0.0
          %406 = vst [vmem:[#allocation2 + $0x58] sm:$0xff] 0.0
          %407 = vst [vmem:[#allocation2 + $0x60] sm:$0xff] 0.0
          %408 = vst [vmem:[#allocation2 + $0x68] sm:$0xff] 0.0
          %409 = vst [vmem:[#allocation2 + $0x70] sm:$0xff] 0.0
          %410 = vst [vmem:[#allocation2 + $0x78] sm:$0xff] 0.0
          %411 = vst [vmem:[#allocation2 + $0x80] sm:$0xff] 0.0
          %412 = vst [vmem:[#allocation2 + $0x88] sm:$0xff] 0.0
          %413 = vst [vmem:[#allocation2 + $0x90] sm:$0xff] 0.0
          %414 = vst [vmem:[#allocation2 + $0x98] sm:$0xff] 0.0
          %415 = vst [vmem:[#allocation2 + $0xa0] sm:$0xff] 0.0
          %416 = vst [vmem:[#allocation2 + $0xa8] sm:$0xff] 0.0
          %417 = vst [vmem:[#allocation2 + $0xb0] sm:$0xff] 0.0
          %418 = vst [vmem:[#allocation2 + $0xb8] sm:$0xff] 0.0
          %419 = vst [vmem:[#allocation2 + $0xc0] sm:$0xff] 0.0
          %420 = vst [vmem:[#allocation2 + $0xc8] sm:$0xff] 0.0
          %421 = vst [vmem:[#allocation2 + $0xd0] sm:$0xff] 0.0
          %422 = vst [vmem:[#allocation2 + $0xd8] sm:$0xff] 0.0
          %423 = vst [vmem:[#allocation2 + $0xe0] sm:$0xff] 0.0
          %424 = vst [vmem:[#allocation2 + $0xe8] sm:$0xff] 0.0
          %425 = vst [vmem:[#allocation2 + $0xf0] sm:$0xff] 0.0
          %426 = vst [vmem:[#allocation2 + $0xf8] sm:$0xff] 0.0
        $region68: #{tpu_custom_call.1} parent=43 // pred_fallthru
          _
        %v427 = vld [vmem:[#allocation2] sm:$0xff]
        %v428 = vld [vmem:[#allocation2 + $0x8] sm:$0xff]
        %v429 = vld [vmem:[#allocation2 + $0x10] sm:$0xff]
        %v430 = vld [vmem:[#allocation2 + $0x18] sm:$0xff]
        %v431 = vld [vmem:[#allocation2 + $0x20] sm:$0xff]
        %v432 = vld [vmem:[#allocation2 + $0x28] sm:$0xff]
        %v433 = vld [vmem:[#allocation2 + $0x30] sm:$0xff]
        %v434 = vld [vmem:[#allocation2 + $0x38] sm:$0xff]
        %v435 = vld [vmem:[#allocation2 + $0x40] sm:$0xff]
        %v436 = vld [vmem:[#allocation2 + $0x48] sm:$0xff]
        %v437 = vld [vmem:[#allocation2 + $0x50] sm:$0xff]
        %v438 = vld [vmem:[#allocation2 + $0x58] sm:$0xff]
        %v439 = vld [vmem:[#allocation2 + $0x60] sm:$0xff]
        %v440 = vld [vmem:[#allocation2 + $0x68] sm:$0xff]
        %v441 = vld [vmem:[#allocation2 + $0x70] sm:$0xff]
        %v442 = vld [vmem:[#allocation2 + $0x78] sm:$0xff]
        %v443 = vld [vmem:[#allocation2 + $0x80] sm:$0xff]
        %v444 = vld [vmem:[#allocation2 + $0x88] sm:$0xff]
        %v445 = vld [vmem:[#allocation2 + $0x90] sm:$0xff]
        %v446 = vld [vmem:[#allocation2 + $0x98] sm:$0xff]
        %v447 = vld [vmem:[#allocation2 + $0xa0] sm:$0xff]
        %v448 = vld [vmem:[#allocation2 + $0xa8] sm:$0xff]
        %v449 = vld [vmem:[#allocation2 + $0xb0] sm:$0xff]
        %v450 = vld [vmem:[#allocation2 + $0xb8] sm:$0xff]
        %v451 = vld [vmem:[#allocation2 + $0xc0] sm:$0xff]
        %v452 = vld [vmem:[#allocation2 + $0xc8] sm:$0xff]
        %v453 = vld [vmem:[#allocation2 + $0xd0] sm:$0xff]
        %v454 = vld [vmem:[#allocation2 + $0xd8] sm:$0xff]
        %v455 = vld [vmem:[#allocation2 + $0xe0] sm:$0xff]
        %v456 = vld [vmem:[#allocation2 + $0xe8] sm:$0xff]
        %v457 = vld [vmem:[#allocation2 + $0xf0] sm:$0xff]
        %v458 = vld [vmem:[#allocation2 + $0xf8] sm:$0xff]
        %v459 = vld [vmem:[%s326] sm:$0xff]
        %v460 = vld [vmem:[%s326 + $0x8] sm:$0xff]
        %v461 = vld [vmem:[%s326 + $0x10] sm:$0xff]
        %v462 = vld [vmem:[%s326 + $0x18] sm:$0xff]
        %v463 = vld [vmem:[%s326 + $0x20] sm:$0xff]
        %v464 = vld [vmem:[%s326 + $0x28] sm:$0xff]
        %v465 = vld [vmem:[%s326 + $0x30] sm:$0xff]
        %v466 = vld [vmem:[%s326 + $0x38] sm:$0xff]
        %v467 = vld [vmem:[%s326 + $0x40] sm:$0xff]
        %v468 = vld [vmem:[%s326 + $0x48] sm:$0xff]
        %v469 = vld [vmem:[%s326 + $0x50] sm:$0xff]
        %v470 = vld [vmem:[%s326 + $0x58] sm:$0xff]
        %v471 = vld [vmem:[%s326 + $0x60] sm:$0xff]
        %v472 = vld [vmem:[%s326 + $0x68] sm:$0xff]
        %v473 = vld [vmem:[%s326 + $0x70] sm:$0xff]
        %v474 = vld [vmem:[%s326 + $0x78] sm:$0xff]
        %v475 = vld [vmem:[%s326 + $0x80] sm:$0xff]
        %v476 = vld [vmem:[%s326 + $0x88] sm:$0xff]
        %v477 = vld [vmem:[%s326 + $0x90] sm:$0xff]
        %v478 = vld [vmem:[%s326 + $0x98] sm:$0xff]
        %v479 = vld [vmem:[%s326 + $0xa0] sm:$0xff]
        %v480 = vld [vmem:[%s326 + $0xa8] sm:$0xff]
        %v481 = vld [vmem:[%s326 + $0xb0] sm:$0xff]
        %v482 = vld [vmem:[%s326 + $0xb8] sm:$0xff]
        %v483 = vld [vmem:[%s326 + $0xc0] sm:$0xff]
        %v484 = vld [vmem:[%s326 + $0xc8] sm:$0xff]
        %v485 = vld [vmem:[%s326 + $0xd0] sm:$0xff]
        %v486 = vld [vmem:[%s326 + $0xd8] sm:$0xff]
        %v487 = vld [vmem:[%s326 + $0xe0] sm:$0xff]
        %v488 = vld [vmem:[%s326 + $0xe8] sm:$0xff]
        %v489 = vld [vmem:[%s326 + $0xf0] sm:$0xff]
        %v490 = vld [vmem:[%s326 + $0xf8] sm:$0xff]
        %v491 = vld [vmem:[%s326 + $0x100] sm:$0xff]
        %v492 = vld [vmem:[%s326 + $0x108] sm:$0xff]
        %v493 = vld [vmem:[%s326 + $0x110] sm:$0xff]
        %v494 = vld [vmem:[%s326 + $0x118] sm:$0xff]
        %v495 = vld [vmem:[%s326 + $0x120] sm:$0xff]
        %v496 = vld [vmem:[%s326 + $0x128] sm:$0xff]
        %v497 = vld [vmem:[%s326 + $0x130] sm:$0xff]
        %v498 = vld [vmem:[%s326 + $0x138] sm:$0xff]
        %v499 = vld [vmem:[%s326 + $0x140] sm:$0xff]
        %v500 = vld [vmem:[%s326 + $0x148] sm:$0xff]
        %v501 = vld [vmem:[%s326 + $0x150] sm:$0xff]
        %v502 = vld [vmem:[%s326 + $0x158] sm:$0xff]
        %v503 = vld [vmem:[%s326 + $0x160] sm:$0xff]
        %v504 = vld [vmem:[%s326 + $0x168] sm:$0xff]
        %v505 = vld [vmem:[%s326 + $0x170] sm:$0xff]
        %v506 = vld [vmem:[%s326 + $0x178] sm:$0xff]
        %v507 = vld [vmem:[%s326 + $0x180] sm:$0xff]
        %v508 = vld [vmem:[%s326 + $0x188] sm:$0xff]
        %v509 = vld [vmem:[%s326 + $0x190] sm:$0xff]
        %v510 = vld [vmem:[%s326 + $0x198] sm:$0xff]
        %v511 = vld [vmem:[%s326 + $0x1a0] sm:$0xff]
        %v512 = vld [vmem:[%s326 + $0x1a8] sm:$0xff]
        %v513 = vld [vmem:[%s326 + $0x1b0] sm:$0xff]
        %v514 = vld [vmem:[%s326 + $0x1b8] sm:$0xff]
        %v515 = vld [vmem:[%s326 + $0x1c0] sm:$0xff]
        %v516 = vld [vmem:[%s326 + $0x1c8] sm:$0xff]
        %v517 = vld [vmem:[%s326 + $0x1d0] sm:$0xff]
        %v518 = vld [vmem:[%s326 + $0x1d8] sm:$0xff]
        %v519 = vld [vmem:[%s326 + $0x1e0] sm:$0xff]
        %v520 = vld [vmem:[%s326 + $0x1e8] sm:$0xff]
        %v521 = vld [vmem:[%s326 + $0x1f0] sm:$0xff]
        %v522 = vld [vmem:[%s326 + $0x1f8] sm:$0xff]
        %v523 = vld [vmem:[#allocation6] sm:$0xf]
        %v524 = vld [vmem:[#allocation6 + $0x4] sm:$0xf]
        %v525 = vld [vmem:[#allocation6 + $0x8] sm:$0xf]
        %v526 = vld [vmem:[#allocation6 + $0xc] sm:$0xf]
        %v527 = vld [vmem:[#allocation6 + $0x10] sm:$0xf]
        %v528 = vld [vmem:[#allocation6 + $0x14] sm:$0xf]
        %v529 = vld [vmem:[#allocation6 + $0x18] sm:$0xf]
        %v530 = vld [vmem:[#allocation6 + $0x1c] sm:$0xf]
        %v531 = vld [vmem:[#allocation6 + $0x20] sm:$0xf]
        %v532 = vld [vmem:[#allocation6 + $0x24] sm:$0xf]
        %v533 = vld [vmem:[#allocation6 + $0x28] sm:$0xf]
        %v534 = vld [vmem:[#allocation6 + $0x2c] sm:$0xf]
        %v535 = vld [vmem:[#allocation6 + $0x30] sm:$0xf]
        %v536 = vld [vmem:[#allocation6 + $0x34] sm:$0xf]
        %v537 = vld [vmem:[#allocation6 + $0x38] sm:$0xf]
        %v538 = vld [vmem:[#allocation6 + $0x3c] sm:$0xf]
        %v539 = vld [vmem:[#allocation6 + $0x40] sm:$0xf]
        %v540 = vld [vmem:[#allocation6 + $0x44] sm:$0xf]
        %v541 = vld [vmem:[#allocation6 + $0x48] sm:$0xf]
        %v542 = vld [vmem:[#allocation6 + $0x4c] sm:$0xf]
        %v543 = vld [vmem:[#allocation6 + $0x50] sm:$0xf]
        %v544 = vld [vmem:[#allocation6 + $0x54] sm:$0xf]
        %v545 = vld [vmem:[#allocation6 + $0x58] sm:$0xf]
        %v546 = vld [vmem:[#allocation6 + $0x5c] sm:$0xf]
        %v547 = vld [vmem:[#allocation6 + $0x60] sm:$0xf]
        %v548 = vld [vmem:[#allocation6 + $0x64] sm:$0xf]
        %v549 = vld [vmem:[#allocation6 + $0x68] sm:$0xf]
        %v550 = vld [vmem:[#allocation6 + $0x6c] sm:$0xf]
        %v551 = vld [vmem:[#allocation6 + $0x70] sm:$0xf]
        %v552 = vld [vmem:[#allocation6 + $0x74] sm:$0xf]
        %v553 = vld [vmem:[#allocation6 + $0x78] sm:$0xf]
        %v554 = vld [vmem:[#allocation6 + $0x7c] sm:$0xf]
        %v555 = vld [vmem:[#allocation6 + $0x80] sm:$0xf]
        %v556 = vld [vmem:[#allocation6 + $0x84] sm:$0xf]
        %v557 = vld [vmem:[#allocation6 + $0x88] sm:$0xf]
        %v558 = vld [vmem:[#allocation6 + $0x8c] sm:$0xf]
        %v559 = vld [vmem:[#allocation6 + $0x90] sm:$0xf]
        %v560 = vld [vmem:[#allocation6 + $0x94] sm:$0xf]
        %v561 = vld [vmem:[#allocation6 + $0x98] sm:$0xf]
        %v562 = vld [vmem:[#allocation6 + $0x9c] sm:$0xf]
        %v563 = vld [vmem:[#allocation6 + $0xa0] sm:$0xf]
        %v564 = vld [vmem:[#allocation6 + $0xa4] sm:$0xf]
        %v565 = vld [vmem:[#allocation6 + $0xa8] sm:$0xf]
        %v566 = vld [vmem:[#allocation6 + $0xac] sm:$0xf]
        %v567 = vld [vmem:[#allocation6 + $0xb0] sm:$0xf]
        %v568 = vld [vmem:[#allocation6 + $0xb4] sm:$0xf]
        %v569 = vld [vmem:[#allocation6 + $0xb8] sm:$0xf]
        %v570 = vld [vmem:[#allocation6 + $0xbc] sm:$0xf]
        %v571 = vld [vmem:[#allocation6 + $0xc0] sm:$0xf]
        %v572 = vld [vmem:[#allocation6 + $0xc4] sm:$0xf]
        %v573 = vld [vmem:[#allocation6 + $0xc8] sm:$0xf]
        %v574 = vld [vmem:[#allocation6 + $0xcc] sm:$0xf]
        %v575 = vld [vmem:[#allocation6 + $0xd0] sm:$0xf]
        %v576 = vld [vmem:[#allocation6 + $0xd4] sm:$0xf]
        %v577 = vld [vmem:[#allocation6 + $0xd8] sm:$0xf]
        %v578 = vld [vmem:[#allocation6 + $0xdc] sm:$0xf]
        %v579 = vld [vmem:[#allocation6 + $0xe0] sm:$0xf]
        %v580 = vld [vmem:[#allocation6 + $0xe4] sm:$0xf]
        %v581 = vld [vmem:[#allocation6 + $0xe8] sm:$0xf]
        %v582 = vld [vmem:[#allocation6 + $0xec] sm:$0xf]
        %v583 = vld [vmem:[#allocation6 + $0xf0] sm:$0xf]
        %v584 = vld [vmem:[#allocation6 + $0xf4] sm:$0xf]
        %v585 = vld [vmem:[#allocation6 + $0xf8] sm:$0xf]
        %v586 = vld [vmem:[#allocation6 + $0xfc] sm:$0xf]
        %v651 = vunpack.c.l.b16 %v459
        %v652 = vunpack.c.h.b16 %v459
        %v653 = vunpack.c.l.b16 %v460
        %v654 = vunpack.c.h.b16 %v460
        %v655 = vunpack.c.l.b16 %v461
        %v656 = vunpack.c.h.b16 %v461
        %v657 = vunpack.c.l.b16 %v462
        %v658 = vunpack.c.h.b16 %v462
        %v659 = vunpack.c.l.b16 %v463
        %v660 = vunpack.c.h.b16 %v463
        %v661 = vunpack.c.l.b16 %v464
        %v662 = vunpack.c.h.b16 %v464
        %v663 = vunpack.c.l.b16 %v465
        %v664 = vunpack.c.h.b16 %v465
        %v665 = vunpack.c.l.b16 %v466
        %v666 = vunpack.c.h.b16 %v466
        %v667 = vunpack.c.l.b16 %v467
        %v668 = vunpack.c.h.b16 %v467
        %v669 = vunpack.c.l.b16 %v468
        %v670 = vunpack.c.h.b16 %v468
        %v671 = vunpack.c.l.b16 %v469
        %v672 = vunpack.c.h.b16 %v469
        %v673 = vunpack.c.l.b16 %v470
        %v674 = vunpack.c.h.b16 %v470
        %v675 = vunpack.c.l.b16 %v471
        %v676 = vunpack.c.h.b16 %v471
        %v677 = vunpack.c.l.b16 %v472
        %v678 = vunpack.c.h.b16 %v472
        %v679 = vunpack.c.l.b16 %v473
        %v680 = vunpack.c.h.b16 %v473
        %v681 = vunpack.c.l.b16 %v474
        %v682 = vunpack.c.h.b16 %v474
        %v683 = vunpack.c.l.b16 %v475
        %v684 = vunpack.c.h.b16 %v475
        %v685 = vunpack.c.l.b16 %v476
        %v686 = vunpack.c.h.b16 %v476
        %v687 = vunpack.c.l.b16 %v477
        %v688 = vunpack.c.h.b16 %v477
        %v689 = vunpack.c.l.b16 %v478
        %v690 = vunpack.c.h.b16 %v478
        %v691 = vunpack.c.l.b16 %v479
        %v692 = vunpack.c.h.b16 %v479
        %v693 = vunpack.c.l.b16 %v480
        %v694 = vunpack.c.h.b16 %v480
        %v695 = vunpack.c.l.b16 %v481
        %v696 = vunpack.c.h.b16 %v481
        %v697 = vunpack.c.l.b16 %v482
        %v698 = vunpack.c.h.b16 %v482
        %v699 = vunpack.c.l.b16 %v483
        %v700 = vunpack.c.h.b16 %v483
        %v701 = vunpack.c.l.b16 %v484
        %v702 = vunpack.c.h.b16 %v484
        %v703 = vunpack.c.l.b16 %v485
        %v704 = vunpack.c.h.b16 %v485
        %v705 = vunpack.c.l.b16 %v486
        %v706 = vunpack.c.h.b16 %v486
        %v707 = vunpack.c.l.b16 %v487
        %v708 = vunpack.c.h.b16 %v487
        %v709 = vunpack.c.l.b16 %v488
        %v710 = vunpack.c.h.b16 %v488
        %v711 = vunpack.c.l.b16 %v489
        %v712 = vunpack.c.h.b16 %v489
        %v713 = vunpack.c.l.b16 %v490
        %v714 = vunpack.c.h.b16 %v490
        %v715 = vunpack.c.l.b16 %v491
        %v716 = vunpack.c.h.b16 %v491
        %v717 = vunpack.c.l.b16 %v492
        %v718 = vunpack.c.h.b16 %v492
        %v719 = vunpack.c.l.b16 %v493
        %v720 = vunpack.c.h.b16 %v493
        %v721 = vunpack.c.l.b16 %v494
        %v722 = vunpack.c.h.b16 %v494
        %v723 = vunpack.c.l.b16 %v495
        %v724 = vunpack.c.h.b16 %v495
        %v725 = vunpack.c.l.b16 %v496
        %v726 = vunpack.c.h.b16 %v496
        %v727 = vunpack.c.l.b16 %v497
        %v728 = vunpack.c.h.b16 %v497
        %v729 = vunpack.c.l.b16 %v498
        %v730 = vunpack.c.h.b16 %v498
        %v731 = vunpack.c.l.b16 %v499
        %v732 = vunpack.c.h.b16 %v499
        %v733 = vunpack.c.l.b16 %v500
        %v734 = vunpack.c.h.b16 %v500
        %v735 = vunpack.c.l.b16 %v501
        %v736 = vunpack.c.h.b16 %v501
        %v737 = vunpack.c.l.b16 %v502
        %v738 = vunpack.c.h.b16 %v502
        %v739 = vunpack.c.l.b16 %v503
        %v740 = vunpack.c.h.b16 %v503
        %v741 = vunpack.c.l.b16 %v504
        %v742 = vunpack.c.h.b16 %v504
        %v743 = vunpack.c.l.b16 %v505
        %v744 = vunpack.c.h.b16 %v505
        %v745 = vunpack.c.l.b16 %v506
        %v746 = vunpack.c.h.b16 %v506
        %v747 = vunpack.c.l.b16 %v507
        %v748 = vunpack.c.h.b16 %v507
        %v749 = vunpack.c.l.b16 %v508
        %v750 = vunpack.c.h.b16 %v508
        %v751 = vunpack.c.l.b16 %v509
        %v752 = vunpack.c.h.b16 %v509
        %v753 = vunpack.c.l.b16 %v510
        %v754 = vunpack.c.h.b16 %v510
        %v755 = vunpack.c.l.b16 %v511
        %v756 = vunpack.c.h.b16 %v511
        %v757 = vunpack.c.l.b16 %v512
        %v758 = vunpack.c.h.b16 %v512
        %v759 = vunpack.c.l.b16 %v513
        %v760 = vunpack.c.h.b16 %v513
        %v761 = vunpack.c.l.b16 %v514
        %v762 = vunpack.c.h.b16 %v514
        %v763 = vunpack.c.l.b16 %v515
        %v764 = vunpack.c.h.b16 %v515
        %v765 = vunpack.c.l.b16 %v516
        %v766 = vunpack.c.h.b16 %v516
        %v767 = vunpack.c.l.b16 %v517
        %v768 = vunpack.c.h.b16 %v517
        %v769 = vunpack.c.l.b16 %v518
        %v770 = vunpack.c.h.b16 %v518
        %v771 = vunpack.c.l.b16 %v519
        %v772 = vunpack.c.h.b16 %v519
        %v773 = vunpack.c.l.b16 %v520
        %v774 = vunpack.c.h.b16 %v520
        %v775 = vunpack.c.l.b16 %v521
        %v776 = vunpack.c.h.b16 %v521
        %v777 = vunpack.c.l.b16 %v522
        %v778 = vunpack.c.h.b16 %v522
        %v779 = vpack.c.b16 %v655, %v651
        %v780 = vpack.c.b16 %v656, %v652
        %v781 = vpack.c.b16 %v657, %v653
        %v782 = vpack.c.b16 %v658, %v654
        %v783 = vpack.c.b16 %v663, %v659
        %v784 = vpack.c.b16 %v664, %v660
        %v785 = vpack.c.b16 %v665, %v661
        %v786 = vpack.c.b16 %v666, %v662
        %v787 = vpack.c.b16 %v671, %v667
        %v788 = vpack.c.b16 %v672, %v668
        %v789 = vpack.c.b16 %v673, %v669
        %v790 = vpack.c.b16 %v674, %v670
        %v791 = vpack.c.b16 %v679, %v675
        %v792 = vpack.c.b16 %v680, %v676
        %v793 = vpack.c.b16 %v681, %v677
        %v794 = vpack.c.b16 %v682, %v678
        %v795 = vpack.c.b16 %v687, %v683
        %v796 = vpack.c.b16 %v688, %v684
        %v797 = vpack.c.b16 %v689, %v685
        %v798 = vpack.c.b16 %v690, %v686
        %v799 = vpack.c.b16 %v695, %v691
        %v800 = vpack.c.b16 %v696, %v692
        %v801 = vpack.c.b16 %v697, %v693
        %v802 = vpack.c.b16 %v698, %v694
        %v803 = vpack.c.b16 %v703, %v699
        %v804 = vpack.c.b16 %v704, %v700
        %v805 = vpack.c.b16 %v705, %v701
        %v806 = vpack.c.b16 %v706, %v702
        %v807 = vpack.c.b16 %v711, %v707
        %v808 = vpack.c.b16 %v712, %v708
        %v809 = vpack.c.b16 %v713, %v709
        %v810 = vpack.c.b16 %v714, %v710
        %v811 = vpack.c.b16 %v719, %v715
        %v812 = vpack.c.b16 %v720, %v716
        %v813 = vpack.c.b16 %v721, %v717
        %v814 = vpack.c.b16 %v722, %v718
        %v815 = vpack.c.b16 %v727, %v723
        %v816 = vpack.c.b16 %v728, %v724
        %v817 = vpack.c.b16 %v729, %v725
        %v818 = vpack.c.b16 %v730, %v726
        %v819 = vpack.c.b16 %v735, %v731
        %v820 = vpack.c.b16 %v736, %v732
        %v821 = vpack.c.b16 %v737, %v733
        %v822 = vpack.c.b16 %v738, %v734
        %v823 = vpack.c.b16 %v743, %v739
        %v824 = vpack.c.b16 %v744, %v740
        %v825 = vpack.c.b16 %v745, %v741
        %v826 = vpack.c.b16 %v746, %v742
        %v827 = vpack.c.b16 %v751, %v747
        %v828 = vpack.c.b16 %v752, %v748
        %v829 = vpack.c.b16 %v753, %v749
        %v830 = vpack.c.b16 %v754, %v750
        %v831 = vpack.c.b16 %v759, %v755
        %v832 = vpack.c.b16 %v760, %v756
        %v833 = vpack.c.b16 %v761, %v757
        %v834 = vpack.c.b16 %v762, %v758
        %v835 = vpack.c.b16 %v767, %v763
        %v836 = vpack.c.b16 %v768, %v764
        %v837 = vpack.c.b16 %v769, %v765
        %v838 = vpack.c.b16 %v770, %v766
        %v839 = vpack.c.b16 %v775, %v771
        %v840 = vpack.c.b16 %v776, %v772
        %v841 = vpack.c.b16 %v777, %v773
        %v842 = vpack.c.b16 %v778, %v774
        %v971 = vunpack.c.l.b16 %v523
        %v972 = vunpack.c.l.b16 %v524
        %v973 = vunpack.c.l.b16 %v525
        %v974 = vunpack.c.l.b16 %v526
        %v975 = vunpack.c.l.b16 %v527
        %v976 = vunpack.c.l.b16 %v528
        %v977 = vunpack.c.l.b16 %v529
        %v978 = vunpack.c.l.b16 %v530
        %v979 = vunpack.c.l.b16 %v531
        %v980 = vunpack.c.l.b16 %v532
        %v981 = vunpack.c.l.b16 %v533
        %v982 = vunpack.c.l.b16 %v534
        %v983 = vunpack.c.l.b16 %v535
        %v984 = vunpack.c.l.b16 %v536
        %v985 = vunpack.c.l.b16 %v537
        %v986 = vunpack.c.l.b16 %v538
        %v987 = vunpack.c.l.b16 %v539
        %v988 = vunpack.c.l.b16 %v540
        %v989 = vunpack.c.l.b16 %v541
        %v990 = vunpack.c.l.b16 %v542
        %v991 = vunpack.c.l.b16 %v543
        %v992 = vunpack.c.l.b16 %v544
        %v993 = vunpack.c.l.b16 %v545
        %v994 = vunpack.c.l.b16 %v546
        %v995 = vunpack.c.l.b16 %v547
        %v996 = vunpack.c.l.b16 %v548
        %v997 = vunpack.c.l.b16 %v549
        %v998 = vunpack.c.l.b16 %v550
        %v999 = vunpack.c.l.b16 %v551
        %v1000 = vunpack.c.l.b16 %v552
        %v1001 = vunpack.c.l.b16 %v553
        %v1002 = vunpack.c.l.b16 %v554
        %v1003 = vunpack.c.l.b16 %v555
        %v1004 = vunpack.c.l.b16 %v556
        %v1005 = vunpack.c.l.b16 %v557
        %v1006 = vunpack.c.l.b16 %v558
        %v1007 = vunpack.c.l.b16 %v559
        %v1008 = vunpack.c.l.b16 %v560
        %v1009 = vunpack.c.l.b16 %v561
        %v1010 = vunpack.c.l.b16 %v562
        %v1011 = vunpack.c.l.b16 %v563
        %v1012 = vunpack.c.l.b16 %v564
        %v1013 = vunpack.c.l.b16 %v565
        %v1014 = vunpack.c.l.b16 %v566
        %v1015 = vunpack.c.l.b16 %v567
        %v1016 = vunpack.c.l.b16 %v568
        %v1017 = vunpack.c.l.b16 %v569
        %v1018 = vunpack.c.l.b16 %v570
        %v1019 = vunpack.c.l.b16 %v571
        %v1020 = vunpack.c.l.b16 %v572
        %v1021 = vunpack.c.l.b16 %v573
        %v1022 = vunpack.c.l.b16 %v574
        %v1023 = vunpack.c.l.b16 %v575
        %v1024 = vunpack.c.l.b16 %v576
        %v1025 = vunpack.c.l.b16 %v577
        %v1026 = vunpack.c.l.b16 %v578
        %v1027 = vunpack.c.l.b16 %v579
        %v1028 = vunpack.c.l.b16 %v580
        %v1029 = vunpack.c.l.b16 %v581
        %v1030 = vunpack.c.l.b16 %v582
        %v1031 = vunpack.c.l.b16 %v583
        %v1032 = vunpack.c.l.b16 %v584
        %v1033 = vunpack.c.l.b16 %v585
        %v1034 = vunpack.c.l.b16 %v586
        %v1035 = vpack.c.b16 %v972, %v971
        %v1036 = vpack.c.b16 %v974, %v973
        %v1037 = vpack.c.b16 %v976, %v975
        %v1038 = vpack.c.b16 %v978, %v977
        %v1039 = vpack.c.b16 %v980, %v979
        %v1040 = vpack.c.b16 %v982, %v981
        %v1041 = vpack.c.b16 %v984, %v983
        %v1042 = vpack.c.b16 %v986, %v985
        %v1043 = vpack.c.b16 %v988, %v987
        %v1044 = vpack.c.b16 %v990, %v989
        %v1045 = vpack.c.b16 %v992, %v991
        %v1046 = vpack.c.b16 %v994, %v993
        %v1047 = vpack.c.b16 %v996, %v995
        %v1048 = vpack.c.b16 %v998, %v997
        %v1049 = vpack.c.b16 %v1000, %v999
        %v1050 = vpack.c.b16 %v1002, %v1001
        %v1051 = vpack.c.b16 %v1004, %v1003
        %v1052 = vpack.c.b16 %v1006, %v1005
        %v1053 = vpack.c.b16 %v1008, %v1007
        %v1054 = vpack.c.b16 %v1010, %v1009
        %v1055 = vpack.c.b16 %v1012, %v1011
        %v1056 = vpack.c.b16 %v1014, %v1013
        %v1057 = vpack.c.b16 %v1016, %v1015
        %v1058 = vpack.c.b16 %v1018, %v1017
        %v1059 = vpack.c.b16 %v1020, %v1019
        %v1060 = vpack.c.b16 %v1022, %v1021
        %v1061 = vpack.c.b16 %v1024, %v1023
        %v1062 = vpack.c.b16 %v1026, %v1025
        %v1063 = vpack.c.b16 %v1028, %v1027
        %v1064 = vpack.c.b16 %v1030, %v1029
        %v1065 = vpack.c.b16 %v1032, %v1031
        %v1066 = vpack.c.b16 %v1034, %v1033
        %1099 = vmatpush.bf16.msra.mxu0 %v1042
        %1100 = vmatpush.bf16.msra.mxu0 %v1041
        %1101 = vmatpush.bf16.msra.mxu0 %v1040
        %1102 = vmatpush.bf16.msra.mxu0 %v1039
        %1103 = vmatpush.bf16.msra.mxu0 %v1038
        %1104 = vmatpush.bf16.msra.mxu0 %v1037
        %1105 = vmatpush.bf16.msra.mxu0 %v1036
        %1106 = vmatpush.bf16.msra.mxu0 %v1035
        %1107 = vmatmul.bf16.gmra.mxu0 %v779
        %v1108 = vpop.f32.mrf.mxu0
        %v1109 = vadd.f32 0.0, %v1108
        %v1110 = vpop.f32.mrf.mxu0
        %v1111 = vadd.f32 0.0, %v1110
        %1112 = vmatmul.bf16.gmra.mxu0 %v783
        %v1113 = vpop.f32.mrf.mxu0
        %v1114 = vadd.f32 0.0, %v1113
        %v1115 = vpop.f32.mrf.mxu0
        %v1116 = vadd.f32 0.0, %v1115
        %1117 = vmatmul.bf16.gmra.mxu0 %v787
        %v1118 = vpop.f32.mrf.mxu0
        %v1119 = vadd.f32 0.0, %v1118
        %v1120 = vpop.f32.mrf.mxu0
        %v1121 = vadd.f32 0.0, %v1120
        %1122 = vmatmul.bf16.gmra.mxu0 %v791
        %v1123 = vpop.f32.mrf.mxu0
        %v1124 = vadd.f32 0.0, %v1123
        %v1125 = vpop.f32.mrf.mxu0
        %v1126 = vadd.f32 0.0, %v1125
        %1127 = vmatmul.bf16.gmra.mxu0 %v795
        %v1128 = vpop.f32.mrf.mxu0
        %v1129 = vadd.f32 0.0, %v1128
        %v1130 = vpop.f32.mrf.mxu0
        %v1131 = vadd.f32 0.0, %v1130
        %1132 = vmatmul.bf16.gmra.mxu0 %v799
        %v1133 = vpop.f32.mrf.mxu0
        %v1134 = vadd.f32 0.0, %v1133
        %v1135 = vpop.f32.mrf.mxu0
        %v1136 = vadd.f32 0.0, %v1135
        %1137 = vmatmul.bf16.gmra.mxu0 %v803
        %v1138 = vpop.f32.mrf.mxu0
        %v1139 = vadd.f32 0.0, %v1138
        %v1140 = vpop.f32.mrf.mxu0
        %v1141 = vadd.f32 0.0, %v1140
        %1142 = vmatmul.bf16.gmra.mxu0 %v807
        %v1143 = vpop.f32.mrf.mxu0
        %v1144 = vadd.f32 0.0, %v1143
        %v1145 = vpop.f32.mrf.mxu0
        %v1146 = vadd.f32 0.0, %v1145
        %1147 = vmatmul.bf16.gmra.mxu0 %v811
        %v1148 = vpop.f32.mrf.mxu0
        %v1149 = vadd.f32 0.0, %v1148
        %v1150 = vpop.f32.mrf.mxu0
        %v1151 = vadd.f32 0.0, %v1150
        %1152 = vmatmul.bf16.gmra.mxu0 %v815
        %v1153 = vpop.f32.mrf.mxu0
        %v1154 = vadd.f32 0.0, %v1153
        %v1155 = vpop.f32.mrf.mxu0
        %v1156 = vadd.f32 0.0, %v1155
        %1157 = vmatmul.bf16.gmra.mxu0 %v819
        %v1158 = vpop.f32.mrf.mxu0
        %v1159 = vadd.f32 0.0, %v1158
        %v1160 = vpop.f32.mrf.mxu0
        %v1161 = vadd.f32 0.0, %v1160
        %1162 = vmatmul.bf16.gmra.mxu0 %v823
        %v1163 = vpop.f32.mrf.mxu0
        %v1164 = vadd.f32 0.0, %v1163
        %v1165 = vpop.f32.mrf.mxu0
        %v1166 = vadd.f32 0.0, %v1165
        %1167 = vmatmul.bf16.gmra.mxu0 %v827
        %v1168 = vpop.f32.mrf.mxu0
        %v1169 = vadd.f32 0.0, %v1168
        %v1170 = vpop.f32.mrf.mxu0
        %v1171 = vadd.f32 0.0, %v1170
        %1172 = vmatmul.bf16.gmra.mxu0 %v831
        %v1173 = vpop.f32.mrf.mxu0
        %v1174 = vadd.f32 0.0, %v1173
        %v1175 = vpop.f32.mrf.mxu0
        %v1176 = vadd.f32 0.0, %v1175
        %1177 = vmatmul.bf16.gmra.mxu0 %v835
        %v1178 = vpop.f32.mrf.mxu0
        %v1179 = vadd.f32 0.0, %v1178
        %v1180 = vpop.f32.mrf.mxu0
        %v1181 = vadd.f32 0.0, %v1180
        %1182 = vmatmul.bf16.gmra.mxu0 %v839
        %v1183 = vpop.f32.mrf.mxu0
        %v1184 = vadd.f32 0.0, %v1183
        %v1185 = vpop.f32.mrf.mxu0
        %v1186 = vadd.f32 0.0, %v1185
        %1187 = vdwg.mxu0
        %1188 = vmatpush.bf16.msra.mxu0 %v1050
        %1189 = vmatpush.bf16.msra.mxu0 %v1049
        %1190 = vmatpush.bf16.msra.mxu0 %v1048
        %1191 = vmatpush.bf16.msra.mxu0 %v1047
        %1192 = vmatpush.bf16.msra.mxu0 %v1046
        %1193 = vmatpush.bf16.msra.mxu0 %v1045
        %1194 = vmatpush.bf16.msra.mxu0 %v1044
        %1195 = vmatpush.bf16.msra.mxu0 %v1043
        %1196 = vmatmul.bf16.gmra.mxu0 %v780
        %v1197 = vpop.f32.mrf.mxu0
        %v1198 = vadd.f32 %v1109, %v1197
        %v1199 = vpop.f32.mrf.mxu0
        %v1200 = vadd.f32 %v1111, %v1199
        %1201 = vmatmul.bf16.gmra.mxu0 %v784
        %v1202 = vpop.f32.mrf.mxu0
        %v1203 = vadd.f32 %v1114, %v1202
        %v1204 = vpop.f32.mrf.mxu0
        %v1205 = vadd.f32 %v1116, %v1204
        %1206 = vmatmul.bf16.gmra.mxu0 %v788
        %v1207 = vpop.f32.mrf.mxu0
        %v1208 = vadd.f32 %v1119, %v1207
        %v1209 = vpop.f32.mrf.mxu0
        %v1210 = vadd.f32 %v1121, %v1209
        %1211 = vmatmul.bf16.gmra.mxu0 %v792
        %v1212 = vpop.f32.mrf.mxu0
        %v1213 = vadd.f32 %v1124, %v1212
        %v1214 = vpop.f32.mrf.mxu0
        %v1215 = vadd.f32 %v1126, %v1214
        %1216 = vmatmul.bf16.gmra.mxu0 %v796
        %v1217 = vpop.f32.mrf.mxu0
        %v1218 = vadd.f32 %v1129, %v1217
        %v1219 = vpop.f32.mrf.mxu0
        %v1220 = vadd.f32 %v1131, %v1219
        %1221 = vmatmul.bf16.gmra.mxu0 %v800
        %v1222 = vpop.f32.mrf.mxu0
        %v1223 = vadd.f32 %v1134, %v1222
        %v1224 = vpop.f32.mrf.mxu0
        %v1225 = vadd.f32 %v1136, %v1224
        %1226 = vmatmul.bf16.gmra.mxu0 %v804
        %v1227 = vpop.f32.mrf.mxu0
        %v1228 = vadd.f32 %v1139, %v1227
        %v1229 = vpop.f32.mrf.mxu0
        %v1230 = vadd.f32 %v1141, %v1229
        %1231 = vmatmul.bf16.gmra.mxu0 %v808
        %v1232 = vpop.f32.mrf.mxu0
        %v1233 = vadd.f32 %v1144, %v1232
        %v1234 = vpop.f32.mrf.mxu0
        %v1235 = vadd.f32 %v1146, %v1234
        %1236 = vmatmul.bf16.gmra.mxu0 %v812
        %v1237 = vpop.f32.mrf.mxu0
        %v1238 = vadd.f32 %v1149, %v1237
        %v1239 = vpop.f32.mrf.mxu0
        %v1240 = vadd.f32 %v1151, %v1239
        %1241 = vmatmul.bf16.gmra.mxu0 %v816
        %v1242 = vpop.f32.mrf.mxu0
        %v1243 = vadd.f32 %v1154, %v1242
        %v1244 = vpop.f32.mrf.mxu0
        %v1245 = vadd.f32 %v1156, %v1244
        %1246 = vmatmul.bf16.gmra.mxu0 %v820
        %v1247 = vpop.f32.mrf.mxu0
        %v1248 = vadd.f32 %v1159, %v1247
        %v1249 = vpop.f32.mrf.mxu0
        %v1250 = vadd.f32 %v1161, %v1249
        %1251 = vmatmul.bf16.gmra.mxu0 %v824
        %v1252 = vpop.f32.mrf.mxu0
        %v1253 = vadd.f32 %v1164, %v1252
        %v1254 = vpop.f32.mrf.mxu0
        %v1255 = vadd.f32 %v1166, %v1254
        %1256 = vmatmul.bf16.gmra.mxu0 %v828
        %v1257 = vpop.f32.mrf.mxu0
        %v1258 = vadd.f32 %v1169, %v1257
        %v1259 = vpop.f32.mrf.mxu0
        %v1260 = vadd.f32 %v1171, %v1259
        %1261 = vmatmul.bf16.gmra.mxu0 %v832
        %v1262 = vpop.f32.mrf.mxu0
        %v1263 = vadd.f32 %v1174, %v1262
        %v1264 = vpop.f32.mrf.mxu0
        %v1265 = vadd.f32 %v1176, %v1264
        %1266 = vmatmul.bf16.gmra.mxu0 %v836
        %v1267 = vpop.f32.mrf.mxu0
        %v1268 = vadd.f32 %v1179, %v1267
        %v1269 = vpop.f32.mrf.mxu0
        %v1270 = vadd.f32 %v1181, %v1269
        %1271 = vmatmul.bf16.gmra.mxu0 %v840
        %v1272 = vpop.f32.mrf.mxu0
        %v1273 = vadd.f32 %v1184, %v1272
        %v1274 = vpop.f32.mrf.mxu0
        %v1275 = vadd.f32 %v1186, %v1274
        %1276 = vdwg.mxu0
        %1277 = vmatpush.bf16.msra.mxu0 %v1058
        %1278 = vmatpush.bf16.msra.mxu0 %v1057
        %1279 = vmatpush.bf16.msra.mxu0 %v1056
        %1280 = vmatpush.bf16.msra.mxu0 %v1055
        %1281 = vmatpush.bf16.msra.mxu0 %v1054
        %1282 = vmatpush.bf16.msra.mxu0 %v1053
        %1283 = vmatpush.bf16.msra.mxu0 %v1052
        %1284 = vmatpush.bf16.msra.mxu0 %v1051
        %1285 = vmatmul.bf16.gmra.mxu0 %v781
        %v1286 = vpop.f32.mrf.mxu0
        %v1287 = vadd.f32 %v1198, %v1286
        %v1288 = vpop.f32.mrf.mxu0
        %v1289 = vadd.f32 %v1200, %v1288
        %1290 = vmatmul.bf16.gmra.mxu0 %v785
        %v1291 = vpop.f32.mrf.mxu0
        %v1292 = vadd.f32 %v1203, %v1291
        %v1293 = vpop.f32.mrf.mxu0
        %v1294 = vadd.f32 %v1205, %v1293
        %1295 = vmatmul.bf16.gmra.mxu0 %v789
        %v1296 = vpop.f32.mrf.mxu0
        %v1297 = vadd.f32 %v1208, %v1296
        %v1298 = vpop.f32.mrf.mxu0
        %v1299 = vadd.f32 %v1210, %v1298
        %1300 = vmatmul.bf16.gmra.mxu0 %v793
        %v1301 = vpop.f32.mrf.mxu0
        %v1302 = vadd.f32 %v1213, %v1301
        %v1303 = vpop.f32.mrf.mxu0
        %v1304 = vadd.f32 %v1215, %v1303
        %1305 = vmatmul.bf16.gmra.mxu0 %v797
        %v1306 = vpop.f32.mrf.mxu0
        %v1307 = vadd.f32 %v1218, %v1306
        %v1308 = vpop.f32.mrf.mxu0
        %v1309 = vadd.f32 %v1220, %v1308
        %1310 = vmatmul.bf16.gmra.mxu0 %v801
        %v1311 = vpop.f32.mrf.mxu0
        %v1312 = vadd.f32 %v1223, %v1311
        %v1313 = vpop.f32.mrf.mxu0
        %v1314 = vadd.f32 %v1225, %v1313
        %1315 = vmatmul.bf16.gmra.mxu0 %v805
        %v1316 = vpop.f32.mrf.mxu0
        %v1317 = vadd.f32 %v1228, %v1316
        %v1318 = vpop.f32.mrf.mxu0
        %v1319 = vadd.f32 %v1230, %v1318
        %1320 = vmatmul.bf16.gmra.mxu0 %v809
        %v1321 = vpop.f32.mrf.mxu0
        %v1322 = vadd.f32 %v1233, %v1321
        %v1323 = vpop.f32.mrf.mxu0
        %v1324 = vadd.f32 %v1235, %v1323
        %1325 = vmatmul.bf16.gmra.mxu0 %v813
        %v1326 = vpop.f32.mrf.mxu0
        %v1327 = vadd.f32 %v1238, %v1326
        %v1328 = vpop.f32.mrf.mxu0
        %v1329 = vadd.f32 %v1240, %v1328
        %1330 = vmatmul.bf16.gmra.mxu0 %v817
        %v1331 = vpop.f32.mrf.mxu0
        %v1332 = vadd.f32 %v1243, %v1331
        %v1333 = vpop.f32.mrf.mxu0
        %v1334 = vadd.f32 %v1245, %v1333
        %1335 = vmatmul.bf16.gmra.mxu0 %v821
        %v1336 = vpop.f32.mrf.mxu0
        %v1337 = vadd.f32 %v1248, %v1336
        %v1338 = vpop.f32.mrf.mxu0
        %v1339 = vadd.f32 %v1250, %v1338
        %1340 = vmatmul.bf16.gmra.mxu0 %v825
        %v1341 = vpop.f32.mrf.mxu0
        %v1342 = vadd.f32 %v1253, %v1341
        %v1343 = vpop.f32.mrf.mxu0
        %v1344 = vadd.f32 %v1255, %v1343
        %1345 = vmatmul.bf16.gmra.mxu0 %v829
        %v1346 = vpop.f32.mrf.mxu0
        %v1347 = vadd.f32 %v1258, %v1346
        %v1348 = vpop.f32.mrf.mxu0
        %v1349 = vadd.f32 %v1260, %v1348
        %1350 = vmatmul.bf16.gmra.mxu0 %v833
        %v1351 = vpop.f32.mrf.mxu0
        %v1352 = vadd.f32 %v1263, %v1351
        %v1353 = vpop.f32.mrf.mxu0
        %v1354 = vadd.f32 %v1265, %v1353
        %1355 = vmatmul.bf16.gmra.mxu0 %v837
        %v1356 = vpop.f32.mrf.mxu0
        %v1357 = vadd.f32 %v1268, %v1356
        %v1358 = vpop.f32.mrf.mxu0
        %v1359 = vadd.f32 %v1270, %v1358
        %1360 = vmatmul.bf16.gmra.mxu0 %v841
        %v1361 = vpop.f32.mrf.mxu0
        %v1362 = vadd.f32 %v1273, %v1361
        %v1363 = vpop.f32.mrf.mxu0
        %v1364 = vadd.f32 %v1275, %v1363
        %1365 = vdwg.mxu0
        %1366 = vmatpush.bf16.msra.mxu0 %v1066
        %1367 = vmatpush.bf16.msra.mxu0 %v1065
        %1368 = vmatpush.bf16.msra.mxu0 %v1064
        %1369 = vmatpush.bf16.msra.mxu0 %v1063
        %1370 = vmatpush.bf16.msra.mxu0 %v1062
        %1371 = vmatpush.bf16.msra.mxu0 %v1061
        %1372 = vmatpush.bf16.msra.mxu0 %v1060
        %1373 = vmatpush.bf16.msra.mxu0 %v1059
        %1374 = vmatmul.bf16.gmra.mxu0 %v782
        %v1375 = vpop.f32.mrf.mxu0
        %v1376 = vadd.f32 %v1287, %v1375
        %v1377 = vpop.f32.mrf.mxu0
        %v1378 = vadd.f32 %v1289, %v1377
        %1379 = vmatmul.bf16.gmra.mxu0 %v786
        %v1380 = vpop.f32.mrf.mxu0
        %v1381 = vadd.f32 %v1292, %v1380
        %v1382 = vpop.f32.mrf.mxu0
        %v1383 = vadd.f32 %v1294, %v1382
        %1384 = vmatmul.bf16.gmra.mxu0 %v790
        %v1385 = vpop.f32.mrf.mxu0
        %v1386 = vadd.f32 %v1297, %v1385
        %v1387 = vpop.f32.mrf.mxu0
        %v1388 = vadd.f32 %v1299, %v1387
        %1389 = vmatmul.bf16.gmra.mxu0 %v794
        %v1390 = vpop.f32.mrf.mxu0
        %v1391 = vadd.f32 %v1302, %v1390
        %v1392 = vpop.f32.mrf.mxu0
        %v1393 = vadd.f32 %v1304, %v1392
        %1394 = vmatmul.bf16.gmra.mxu0 %v798
        %v1395 = vpop.f32.mrf.mxu0
        %v1396 = vadd.f32 %v1307, %v1395
        %v1397 = vpop.f32.mrf.mxu0
        %v1398 = vadd.f32 %v1309, %v1397
        %1399 = vmatmul.bf16.gmra.mxu0 %v802
        %v1400 = vpop.f32.mrf.mxu0
        %v1401 = vadd.f32 %v1312, %v1400
        %v1402 = vpop.f32.mrf.mxu0
        %v1403 = vadd.f32 %v1314, %v1402
        %1404 = vmatmul.bf16.gmra.mxu0 %v806
        %v1405 = vpop.f32.mrf.mxu0
        %v1406 = vadd.f32 %v1317, %v1405
        %v1407 = vpop.f32.mrf.mxu0
        %v1408 = vadd.f32 %v1319, %v1407
        %1409 = vmatmul.bf16.gmra.mxu0 %v810
        %v1410 = vpop.f32.mrf.mxu0
        %v1411 = vadd.f32 %v1322, %v1410
        %v1412 = vpop.f32.mrf.mxu0
        %v1413 = vadd.f32 %v1324, %v1412
        %1414 = vmatmul.bf16.gmra.mxu0 %v814
        %v1415 = vpop.f32.mrf.mxu0
        %v1416 = vadd.f32 %v1327, %v1415
        %v1417 = vpop.f32.mrf.mxu0
        %v1418 = vadd.f32 %v1329, %v1417
        %1419 = vmatmul.bf16.gmra.mxu0 %v818
        %v1420 = vpop.f32.mrf.mxu0
        %v1421 = vadd.f32 %v1332, %v1420
        %v1422 = vpop.f32.mrf.mxu0
        %v1423 = vadd.f32 %v1334, %v1422
        %1424 = vmatmul.bf16.gmra.mxu0 %v822
        %v1425 = vpop.f32.mrf.mxu0
        %v1426 = vadd.f32 %v1337, %v1425
        %v1427 = vpop.f32.mrf.mxu0
        %v1428 = vadd.f32 %v1339, %v1427
        %1429 = vmatmul.bf16.gmra.mxu0 %v826
        %v1430 = vpop.f32.mrf.mxu0
        %v1431 = vadd.f32 %v1342, %v1430
        %v1432 = vpop.f32.mrf.mxu0
        %v1433 = vadd.f32 %v1344, %v1432
        %1434 = vmatmul.bf16.gmra.mxu0 %v830
        %v1435 = vpop.f32.mrf.mxu0
        %v1436 = vadd.f32 %v1347, %v1435
        %v1437 = vpop.f32.mrf.mxu0
        %v1438 = vadd.f32 %v1349, %v1437
        %1439 = vmatmul.bf16.gmra.mxu0 %v834
        %v1440 = vpop.f32.mrf.mxu0
        %v1441 = vadd.f32 %v1352, %v1440
        %v1442 = vpop.f32.mrf.mxu0
        %v1443 = vadd.f32 %v1354, %v1442
        %1444 = vmatmul.bf16.gmra.mxu0 %v838
        %v1445 = vpop.f32.mrf.mxu0
        %v1446 = vadd.f32 %v1357, %v1445
        %v1447 = vpop.f32.mrf.mxu0
        %v1448 = vadd.f32 %v1359, %v1447
        %1449 = vmatmul.bf16.gmra.mxu0 %v842
        %v1450 = vpop.f32.mrf.mxu0
        %v1451 = vadd.f32 %v1362, %v1450
        %v1452 = vpop.f32.mrf.mxu0
        %v1453 = vadd.f32 %v1364, %v1452
        %1454 = vdwg.mxu0
        %v1455 = vadd.f32 %v427, %v1376
        %v1456 = vadd.f32 %v428, %v1378
        %v1457 = vadd.f32 %v429, %v1381
        %v1458 = vadd.f32 %v430, %v1383
        %v1459 = vadd.f32 %v431, %v1386
        %v1460 = vadd.f32 %v432, %v1388
        %v1461 = vadd.f32 %v433, %v1391
        %v1462 = vadd.f32 %v434, %v1393
        %v1463 = vadd.f32 %v435, %v1396
        %v1464 = vadd.f32 %v436, %v1398
        %v1465 = vadd.f32 %v437, %v1401
        %v1466 = vadd.f32 %v438, %v1403
        %v1467 = vadd.f32 %v439, %v1406
        %v1468 = vadd.f32 %v440, %v1408
        %v1469 = vadd.f32 %v441, %v1411
        %v1470 = vadd.f32 %v442, %v1413
        %v1471 = vadd.f32 %v443, %v1416
        %v1472 = vadd.f32 %v444, %v1418
        %v1473 = vadd.f32 %v445, %v1421
        %v1474 = vadd.f32 %v446, %v1423
        %v1475 = vadd.f32 %v447, %v1426
        %v1476 = vadd.f32 %v448, %v1428
        %v1477 = vadd.f32 %v449, %v1431
        %v1478 = vadd.f32 %v450, %v1433
        %v1479 = vadd.f32 %v451, %v1436
        %v1480 = vadd.f32 %v452, %v1438
        %v1481 = vadd.f32 %v453, %v1441
        %v1482 = vadd.f32 %v454, %v1443
        %v1483 = vadd.f32 %v455, %v1446
        %v1484 = vadd.f32 %v456, %v1448
        %v1485 = vadd.f32 %v457, %v1451
        %v1486 = vadd.f32 %v458, %v1453
        %1487 = vst [vmem:[#allocation2] sm:$0xff] %v1455
        %1488 = vst [vmem:[#allocation2 + $0x8] sm:$0xff] %v1456
        %1489 = vst [vmem:[#allocation2 + $0x10] sm:$0xff] %v1457
        %1490 = vst [vmem:[#allocation2 + $0x18] sm:$0xff] %v1458
        %1491 = vst [vmem:[#allocation2 + $0x20] sm:$0xff] %v1459
        %1492 = vst [vmem:[#allocation2 + $0x28] sm:$0xff] %v1460
        %1493 = vst [vmem:[#allocation2 + $0x30] sm:$0xff] %v1461
        %1494 = vst [vmem:[#allocation2 + $0x38] sm:$0xff] %v1462
        %1495 = vst [vmem:[#allocation2 + $0x40] sm:$0xff] %v1463
        %1496 = vst [vmem:[#allocation2 + $0x48] sm:$0xff] %v1464
        %1497 = vst [vmem:[#allocation2 + $0x50] sm:$0xff] %v1465
        %1498 = vst [vmem:[#allocation2 + $0x58] sm:$0xff] %v1466
        %1499 = vst [vmem:[#allocation2 + $0x60] sm:$0xff] %v1467
        %1500 = vst [vmem:[#allocation2 + $0x68] sm:$0xff] %v1468
        %1501 = vst [vmem:[#allocation2 + $0x70] sm:$0xff] %v1469
        %1502 = vst [vmem:[#allocation2 + $0x78] sm:$0xff] %v1470
        %1503 = vst [vmem:[#allocation2 + $0x80] sm:$0xff] %v1471
        %1504 = vst [vmem:[#allocation2 + $0x88] sm:$0xff] %v1472
        %1505 = vst [vmem:[#allocation2 + $0x90] sm:$0xff] %v1473
        %1506 = vst [vmem:[#allocation2 + $0x98] sm:$0xff] %v1474
        %1507 = vst [vmem:[#allocation2 + $0xa0] sm:$0xff] %v1475
        %1508 = vst [vmem:[#allocation2 + $0xa8] sm:$0xff] %v1476
        %1509 = vst [vmem:[#allocation2 + $0xb0] sm:$0xff] %v1477
        %1510 = vst [vmem:[#allocation2 + $0xb8] sm:$0xff] %v1478
        %1511 = vst [vmem:[#allocation2 + $0xc0] sm:$0xff] %v1479
        %1512 = vst [vmem:[#allocation2 + $0xc8] sm:$0xff] %v1480
        %1513 = vst [vmem:[#allocation2 + $0xd0] sm:$0xff] %v1481
        %1514 = vst [vmem:[#allocation2 + $0xd8] sm:$0xff] %v1482
        %1515 = vst [vmem:[#allocation2 + $0xe0] sm:$0xff] %v1483
        %1516 = vst [vmem:[#allocation2 + $0xe8] sm:$0xff] %v1484
        %1517 = vst [vmem:[#allocation2 + $0xf0] sm:$0xff] %v1485
        %1518 = vst [vmem:[#allocation2 + $0xf8] sm:$0xff] %v1486
        // Predicated region
        $region69: #{tpu_custom_call.1} parent=43 // pred_check
          %p1519 = pneg %p391
        $region70: #{tpu_custom_call.1} parent=43 // pred_check_branch
          %1521 = sbr.rel (%p1519) target = $region72
        $region71: #{tpu_custom_call.1} parent=43 // pred_region
          %v1522 = vld [vmem:[#allocation2] sm:$0xff]
          %v1523 = vld [vmem:[#allocation2 + $0x8] sm:$0xff]
          %v1524 = vld [vmem:[#allocation2 + $0x10] sm:$0xff]
          %v1525 = vld [vmem:[#allocation2 + $0x18] sm:$0xff]
          %v1526 = vld [vmem:[#allocation2 + $0x20] sm:$0xff]
          %v1527 = vld [vmem:[#allocation2 + $0x28] sm:$0xff]
          %v1528 = vld [vmem:[#allocation2 + $0x30] sm:$0xff]
          %v1529 = vld [vmem:[#allocation2 + $0x38] sm:$0xff]
          %v1530 = vld [vmem:[#allocation2 + $0x40] sm:$0xff]
          %v1531 = vld [vmem:[#allocation2 + $0x48] sm:$0xff]
          %v1532 = vld [vmem:[#allocation2 + $0x50] sm:$0xff]
          %v1533 = vld [vmem:[#allocation2 + $0x58] sm:$0xff]
          %v1534 = vld [vmem:[#allocation2 + $0x60] sm:$0xff]
          %v1535 = vld [vmem:[#allocation2 + $0x68] sm:$0xff]
          %v1536 = vld [vmem:[#allocation2 + $0x70] sm:$0xff]
          %v1537 = vld [vmem:[#allocation2 + $0x78] sm:$0xff]
          %v1538 = vld [vmem:[#allocation2 + $0x80] sm:$0xff]
          %v1539 = vld [vmem:[#allocation2 + $0x88] sm:$0xff]
          %v1540 = vld [vmem:[#allocation2 + $0x90] sm:$0xff]
          %v1541 = vld [vmem:[#allocation2 + $0x98] sm:$0xff]
          %v1542 = vld [vmem:[#allocation2 + $0xa0] sm:$0xff]
          %v1543 = vld [vmem:[#allocation2 + $0xa8] sm:$0xff]
          %v1544 = vld [vmem:[#allocation2 + $0xb0] sm:$0xff]
          %v1545 = vld [vmem:[#allocation2 + $0xb8] sm:$0xff]
          %v1546 = vld [vmem:[#allocation2 + $0xc0] sm:$0xff]
          %v1547 = vld [vmem:[#allocation2 + $0xc8] sm:$0xff]
          %v1548 = vld [vmem:[#allocation2 + $0xd0] sm:$0xff]
          %v1549 = vld [vmem:[#allocation2 + $0xd8] sm:$0xff]
          %v1550 = vld [vmem:[#allocation2 + $0xe0] sm:$0xff]
          %v1551 = vld [vmem:[#allocation2 + $0xe8] sm:$0xff]
          %v1552 = vld [vmem:[#allocation2 + $0xf0] sm:$0xff]
          %v1553 = vld [vmem:[#allocation2 + $0xf8] sm:$0xff]
          %v1554 = vpack.c.bf16 %v1523, %v1522
          %v1555 = vpack.c.bf16 %v1525, %v1524
          %v1556 = vpack.c.bf16 %v1527, %v1526
          %v1557 = vpack.c.bf16 %v1529, %v1528
          %v1558 = vpack.c.bf16 %v1531, %v1530
          %v1559 = vpack.c.bf16 %v1533, %v1532
          %v1560 = vpack.c.bf16 %v1535, %v1534
          %v1561 = vpack.c.bf16 %v1537, %v1536
          %v1562 = vpack.c.bf16 %v1539, %v1538
          %v1563 = vpack.c.bf16 %v1541, %v1540
          %v1564 = vpack.c.bf16 %v1543, %v1542
          %v1565 = vpack.c.bf16 %v1545, %v1544
          %v1566 = vpack.c.bf16 %v1547, %v1546
          %v1567 = vpack.c.bf16 %v1549, %v1548
          %v1568 = vpack.c.bf16 %v1551, %v1550
          %v1569 = vpack.c.bf16 %v1553, %v1552
          %v1570 = vld [vmem:[#allocation9] sm:$0xf]
          %v1571 = vld [vmem:[#allocation9 + $0x4] sm:$0xf]
          %v1572 = vld [vmem:[#allocation9 + $0x8] sm:$0xf]
          %v1573 = vld [vmem:[#allocation9 + $0xc] sm:$0xf]
          %v1574 = vld [vmem:[#allocation9 + $0x10] sm:$0xf]
          %v1575 = vld [vmem:[#allocation9 + $0x14] sm:$0xf]
          %v1576 = vld [vmem:[#allocation9 + $0x18] sm:$0xf]
          %v1577 = vld [vmem:[#allocation9 + $0x1c] sm:$0xf]
          %v1578 = vld [vmem:[#allocation9 + $0x20] sm:$0xf]
          %v1579 = vld [vmem:[#allocation9 + $0x24] sm:$0xf]
          %v1580 = vld [vmem:[#allocation9 + $0x28] sm:$0xf]
          %v1581 = vld [vmem:[#allocation9 + $0x2c] sm:$0xf]
          %v1582 = vld [vmem:[#allocation9 + $0x30] sm:$0xf]
          %v1583 = vld [vmem:[#allocation9 + $0x34] sm:$0xf]
          %v1584 = vld [vmem:[#allocation9 + $0x38] sm:$0xf]
          %v1585 = vld [vmem:[#allocation9 + $0x3c] sm:$0xf]
          %v1586 = vld [vmem:[%s341] sm:$0xf]
          %v1587 = vld [vmem:[%s341 + $0x4] sm:$0xf]
          %v1588 = vld [vmem:[%s341 + $0x8] sm:$0xf]
          %v1589 = vld [vmem:[%s341 + $0xc] sm:$0xf]
          %v1590 = vld [vmem:[%s341 + $0x10] sm:$0xf]
          %v1591 = vld [vmem:[%s341 + $0x14] sm:$0xf]
          %v1592 = vld [vmem:[%s341 + $0x18] sm:$0xf]
          %v1593 = vld [vmem:[%s341 + $0x1c] sm:$0xf]
          %v1594 = vld [vmem:[%s341 + $0x20] sm:$0xf]
          %v1595 = vld [vmem:[%s341 + $0x24] sm:$0xf]
          %v1596 = vld [vmem:[%s341 + $0x28] sm:$0xf]
          %v1597 = vld [vmem:[%s341 + $0x2c] sm:$0xf]
          %v1598 = vld [vmem:[%s341 + $0x30] sm:$0xf]
          %v1599 = vld [vmem:[%s341 + $0x34] sm:$0xf]
          %v1600 = vld [vmem:[%s341 + $0x38] sm:$0xf]
          %v1601 = vld [vmem:[%s341 + $0x3c] sm:$0xf]
          %v1602 = vld [vmem:[%s341 + $0x40] sm:$0xf]
          %v1603 = vld [vmem:[%s341 + $0x44] sm:$0xf]
          %v1604 = vld [vmem:[%s341 + $0x48] sm:$0xf]
          %v1605 = vld [vmem:[%s341 + $0x4c] sm:$0xf]
          %v1606 = vld [vmem:[%s341 + $0x50] sm:$0xf]
          %v1607 = vld [vmem:[%s341 + $0x54] sm:$0xf]
          %v1608 = vld [vmem:[%s341 + $0x58] sm:$0xf]
          %v1609 = vld [vmem:[%s341 + $0x5c] sm:$0xf]
          %v1610 = vld [vmem:[%s341 + $0x60] sm:$0xf]
          %v1611 = vld [vmem:[%s341 + $0x64] sm:$0xf]
          %v1612 = vld [vmem:[%s341 + $0x68] sm:$0xf]
          %v1613 = vld [vmem:[%s341 + $0x6c] sm:$0xf]
          %v1614 = vld [vmem:[%s341 + $0x70] sm:$0xf]
          %v1615 = vld [vmem:[%s341 + $0x74] sm:$0xf]
          %v1616 = vld [vmem:[%s341 + $0x78] sm:$0xf]
          %v1617 = vld [vmem:[%s341 + $0x7c] sm:$0xf]
          %v1618 = vld [vmem:[#allocation10] sm:$0xf]
          %v1619 = vld [vmem:[#allocation10 + $0x4] sm:$0xf]
          %v1620 = vld [vmem:[#allocation10 + $0x8] sm:$0xf]
          %v1621 = vld [vmem:[#allocation10 + $0xc] sm:$0xf]
          %v1622 = vld [vmem:[#allocation10 + $0x10] sm:$0xf]
          %v1623 = vld [vmem:[#allocation10 + $0x14] sm:$0xf]
          %v1624 = vld [vmem:[#allocation10 + $0x18] sm:$0xf]
          %v1625 = vld [vmem:[#allocation10 + $0x1c] sm:$0xf]
          %v1626 = vld [vmem:[#allocation10 + $0x20] sm:$0xf]
          %v1627 = vld [vmem:[#allocation10 + $0x24] sm:$0xf]
          %v1628 = vld [vmem:[#allocation10 + $0x28] sm:$0xf]
          %v1629 = vld [vmem:[#allocation10 + $0x2c] sm:$0xf]
          %v1630 = vld [vmem:[#allocation10 + $0x30] sm:$0xf]
          %v1631 = vld [vmem:[#allocation10 + $0x34] sm:$0xf]
          %v1632 = vld [vmem:[#allocation10 + $0x38] sm:$0xf]
          %v1633 = vld [vmem:[#allocation10 + $0x3c] sm:$0xf]
          %v1666 = vunpack.c.l.b16 %v1586
          %v1667 = vunpack.c.l.b16 %v1587
          %v1668 = vunpack.c.l.b16 %v1588
          %v1669 = vunpack.c.l.b16 %v1589
          %v1670 = vunpack.c.l.b16 %v1590
          %v1671 = vunpack.c.l.b16 %v1591
          %v1672 = vunpack.c.l.b16 %v1592
          %v1673 = vunpack.c.l.b16 %v1593
          %v1674 = vunpack.c.l.b16 %v1594
          %v1675 = vunpack.c.l.b16 %v1595
          %v1676 = vunpack.c.l.b16 %v1596
          %v1677 = vunpack.c.l.b16 %v1597
          %v1678 = vunpack.c.l.b16 %v1598
          %v1679 = vunpack.c.l.b16 %v1599
          %v1680 = vunpack.c.l.b16 %v1600
          %v1681 = vunpack.c.l.b16 %v1601
          %v1682 = vunpack.c.l.b16 %v1602
          %v1683 = vunpack.c.l.b16 %v1603
          %v1684 = vunpack.c.l.b16 %v1604
          %v1685 = vunpack.c.l.b16 %v1605
          %v1686 = vunpack.c.l.b16 %v1606
          %v1687 = vunpack.c.l.b16 %v1607
          %v1688 = vunpack.c.l.b16 %v1608
          %v1689 = vunpack.c.l.b16 %v1609
          %v1690 = vunpack.c.l.b16 %v1610
          %v1691 = vunpack.c.l.b16 %v1611
          %v1692 = vunpack.c.l.b16 %v1612
          %v1693 = vunpack.c.l.b16 %v1613
          %v1694 = vunpack.c.l.b16 %v1614
          %v1695 = vunpack.c.l.b16 %v1615
          %v1696 = vunpack.c.l.b16 %v1616
          %v1697 = vunpack.c.l.b16 %v1617
          %v1698 = vpack.c.b16 %v1667, %v1666
          %v1699 = vpack.c.b16 %v1669, %v1668
          %v1700 = vpack.c.b16 %v1671, %v1670
          %v1701 = vpack.c.b16 %v1673, %v1672
          %v1702 = vpack.c.b16 %v1675, %v1674
          %v1703 = vpack.c.b16 %v1677, %v1676
          %v1704 = vpack.c.b16 %v1679, %v1678
          %v1705 = vpack.c.b16 %v1681, %v1680
          %v1706 = vpack.c.b16 %v1683, %v1682
          %v1707 = vpack.c.b16 %v1685, %v1684
          %v1708 = vpack.c.b16 %v1687, %v1686
          %v1709 = vpack.c.b16 %v1689, %v1688
          %v1710 = vpack.c.b16 %v1691, %v1690
          %v1711 = vpack.c.b16 %v1693, %v1692
          %v1712 = vpack.c.b16 %v1695, %v1694
          %v1713 = vpack.c.b16 %v1697, %v1696
          %v1746 = vunpack.c.l.b16 %v1618
          %v1747 = vunpack.c.l.b16 %v1619
          %v1748 = vunpack.c.l.b16 %v1620
          %v1749 = vunpack.c.l.b16 %v1621
          %v1750 = vunpack.c.l.b16 %v1622
          %v1751 = vunpack.c.l.b16 %v1623
          %v1752 = vunpack.c.l.b16 %v1624
          %v1753 = vunpack.c.l.b16 %v1625
          %v1754 = vunpack.c.l.b16 %v1626
          %v1755 = vunpack.c.l.b16 %v1627
          %v1756 = vunpack.c.l.b16 %v1628
          %v1757 = vunpack.c.l.b16 %v1629
          %v1758 = vunpack.c.l.b16 %v1630
          %v1759 = vunpack.c.l.b16 %v1631
          %v1760 = vunpack.c.l.b16 %v1632
          %v1761 = vunpack.c.l.b16 %v1633
          %v1762 = vpack.c.b16 %v1747, %v1746
          %v1763 = vpack.c.b16 %v1749, %v1748
          %v1764 = vpack.c.b16 %v1751, %v1750
          %v1765 = vpack.c.b16 %v1753, %v1752
          %v1766 = vpack.c.b16 %v1755, %v1754
          %v1767 = vpack.c.b16 %v1757, %v1756
          %v1768 = vpack.c.b16 %v1759, %v1758
          %v1769 = vpack.c.b16 %v1761, %v1760
          %1778 = vmatpush.bf16.msra.mxu0 %v1769
          %1779 = vmatpush.bf16.msra.mxu0 %v1768
          %1780 = vmatpush.bf16.msra.mxu0 %v1767
          %1781 = vmatpush.bf16.msra.mxu0 %v1766
          %1782 = vmatpush.bf16.msra.mxu0 %v1765
          %1783 = vmatpush.bf16.msra.mxu0 %v1764
          %1784 = vmatpush.bf16.msra.mxu0 %v1763
          %1785 = vmatpush.bf16.msra.mxu0 %v1762
          %1786 = vmatmul.bf16.gmra.mxu0 %v1698
          %v1787 = vpop.f32.mrf.mxu0
          %v1788 = vadd.f32 0.0, %v1787
          %v1789 = vpop.f32.mrf.mxu0
          %v1790 = vadd.f32 0.0, %v1789
          %1791 = vmatmul.bf16.gmra.mxu0 %v1699
          %v1792 = vpop.f32.mrf.mxu0
          %v1793 = vadd.f32 0.0, %v1792
          %v1794 = vpop.f32.mrf.mxu0
          %v1795 = vadd.f32 0.0, %v1794
          %1796 = vmatmul.bf16.gmra.mxu0 %v1700
          %v1797 = vpop.f32.mrf.mxu0
          %v1798 = vadd.f32 0.0, %v1797
          %v1799 = vpop.f32.mrf.mxu0
          %v1800 = vadd.f32 0.0, %v1799
          %1801 = vmatmul.bf16.gmra.mxu0 %v1701
          %v1802 = vpop.f32.mrf.mxu0
          %v1803 = vadd.f32 0.0, %v1802
          %v1804 = vpop.f32.mrf.mxu0
          %v1805 = vadd.f32 0.0, %v1804
          %1806 = vmatmul.bf16.gmra.mxu0 %v1702
          %v1807 = vpop.f32.mrf.mxu0
          %v1808 = vadd.f32 0.0, %v1807
          %v1809 = vpop.f32.mrf.mxu0
          %v1810 = vadd.f32 0.0, %v1809
          %1811 = vmatmul.bf16.gmra.mxu0 %v1703
          %v1812 = vpop.f32.mrf.mxu0
          %v1813 = vadd.f32 0.0, %v1812
          %v1814 = vpop.f32.mrf.mxu0
          %v1815 = vadd.f32 0.0, %v1814
          %1816 = vmatmul.bf16.gmra.mxu0 %v1704
          %v1817 = vpop.f32.mrf.mxu0
          %v1818 = vadd.f32 0.0, %v1817
          %v1819 = vpop.f32.mrf.mxu0
          %v1820 = vadd.f32 0.0, %v1819
          %1821 = vmatmul.bf16.gmra.mxu0 %v1705
          %v1822 = vpop.f32.mrf.mxu0
          %v1823 = vadd.f32 0.0, %v1822
          %v1824 = vpop.f32.mrf.mxu0
          %v1825 = vadd.f32 0.0, %v1824
          %1826 = vmatmul.bf16.gmra.mxu0 %v1706
          %v1827 = vpop.f32.mrf.mxu0
          %v1828 = vadd.f32 0.0, %v1827
          %v1829 = vpop.f32.mrf.mxu0
          %v1830 = vadd.f32 0.0, %v1829
          %1831 = vmatmul.bf16.gmra.mxu0 %v1707
          %v1832 = vpop.f32.mrf.mxu0
          %v1833 = vadd.f32 0.0, %v1832
          %v1834 = vpop.f32.mrf.mxu0
          %v1835 = vadd.f32 0.0, %v1834
          %1836 = vmatmul.bf16.gmra.mxu0 %v1708
          %v1837 = vpop.f32.mrf.mxu0
          %v1838 = vadd.f32 0.0, %v1837
          %v1839 = vpop.f32.mrf.mxu0
          %v1840 = vadd.f32 0.0, %v1839
          %1841 = vmatmul.bf16.gmra.mxu0 %v1709
          %v1842 = vpop.f32.mrf.mxu0
          %v1843 = vadd.f32 0.0, %v1842
          %v1844 = vpop.f32.mrf.mxu0
          %v1845 = vadd.f32 0.0, %v1844
          %1846 = vmatmul.bf16.gmra.mxu0 %v1710
          %v1847 = vpop.f32.mrf.mxu0
          %v1848 = vadd.f32 0.0, %v1847
          %v1849 = vpop.f32.mrf.mxu0
          %v1850 = vadd.f32 0.0, %v1849
          %1851 = vmatmul.bf16.gmra.mxu0 %v1711
          %v1852 = vpop.f32.mrf.mxu0
          %v1853 = vadd.f32 0.0, %v1852
          %v1854 = vpop.f32.mrf.mxu0
          %v1855 = vadd.f32 0.0, %v1854
          %1856 = vmatmul.bf16.gmra.mxu0 %v1712
          %v1857 = vpop.f32.mrf.mxu0
          %v1858 = vadd.f32 0.0, %v1857
          %v1859 = vpop.f32.mrf.mxu0
          %v1860 = vadd.f32 0.0, %v1859
          %1861 = vmatmul.bf16.gmra.mxu0 %v1713
          %v1862 = vpop.f32.mrf.mxu0
          %v1863 = vadd.f32 0.0, %v1862
          %v1864 = vpop.f32.mrf.mxu0
          %v1865 = vadd.f32 0.0, %v1864
          %1866 = vdwg.mxu0
          %v1883 = vunpack.c.l.b16 %v1570
          %v1884 = vunpack.c.l.b16 %v1571
          %v1885 = vunpack.c.l.b16 %v1572
          %v1886 = vunpack.c.l.b16 %v1573
          %v1887 = vunpack.c.l.b16 %v1574
          %v1888 = vunpack.c.l.b16 %v1575
          %v1889 = vunpack.c.l.b16 %v1576
          %v1890 = vunpack.c.l.b16 %v1577
          %v1891 = vunpack.c.l.b16 %v1578
          %v1892 = vunpack.c.l.b16 %v1579
          %v1893 = vunpack.c.l.b16 %v1580
          %v1894 = vunpack.c.l.b16 %v1581
          %v1895 = vunpack.c.l.b16 %v1582
          %v1896 = vunpack.c.l.b16 %v1583
          %v1897 = vunpack.c.l.b16 %v1584
          %v1898 = vunpack.c.l.b16 %v1585
          %v1899 = vpack.c.b16 %v1884, %v1883
          %v1900 = vpack.c.b16 %v1886, %v1885
          %v1901 = vpack.c.b16 %v1888, %v1887
          %v1902 = vpack.c.b16 %v1890, %v1889
          %v1903 = vpack.c.b16 %v1892, %v1891
          %v1904 = vpack.c.b16 %v1894, %v1893
          %v1905 = vpack.c.b16 %v1896, %v1895
          %v1906 = vpack.c.b16 %v1898, %v1897
          %1915 = vmatpush.bf16.msra.mxu0 %v1906
          %1916 = vmatpush.bf16.msra.mxu0 %v1905
          %1917 = vmatpush.bf16.msra.mxu0 %v1904
          %1918 = vmatpush.bf16.msra.mxu0 %v1903
          %1919 = vmatpush.bf16.msra.mxu0 %v1902
          %1920 = vmatpush.bf16.msra.mxu0 %v1901
          %1921 = vmatpush.bf16.msra.mxu0 %v1900
          %1922 = vmatpush.bf16.msra.mxu0 %v1899
          %1923 = vmatmul.bf16.gmra.mxu0 %v1554
          %v1924 = vpop.f32.mrf.mxu0
          %v1925 = vadd.f32 %v1788, %v1924
          %v1926 = vpop.f32.mrf.mxu0
          %v1927 = vadd.f32 %v1790, %v1926
          %1928 = vmatmul.bf16.gmra.mxu0 %v1555
          %v1929 = vpop.f32.mrf.mxu0
          %v1930 = vadd.f32 %v1793, %v1929
          %v1931 = vpop.f32.mrf.mxu0
          %v1932 = vadd.f32 %v1795, %v1931
          %1933 = vmatmul.bf16.gmra.mxu0 %v1556
          %v1934 = vpop.f32.mrf.mxu0
          %v1935 = vadd.f32 %v1798, %v1934
          %v1936 = vpop.f32.mrf.mxu0
          %v1937 = vadd.f32 %v1800, %v1936
          %1938 = vmatmul.bf16.gmra.mxu0 %v1557
          %v1939 = vpop.f32.mrf.mxu0
          %v1940 = vadd.f32 %v1803, %v1939
          %v1941 = vpop.f32.mrf.mxu0
          %v1942 = vadd.f32 %v1805, %v1941
          %1943 = vmatmul.bf16.gmra.mxu0 %v1558
          %v1944 = vpop.f32.mrf.mxu0
          %v1945 = vadd.f32 %v1808, %v1944
          %v1946 = vpop.f32.mrf.mxu0
          %v1947 = vadd.f32 %v1810, %v1946
          %1948 = vmatmul.bf16.gmra.mxu0 %v1559
          %v1949 = vpop.f32.mrf.mxu0
          %v1950 = vadd.f32 %v1813, %v1949
          %v1951 = vpop.f32.mrf.mxu0
          %v1952 = vadd.f32 %v1815, %v1951
          %1953 = vmatmul.bf16.gmra.mxu0 %v1560
          %v1954 = vpop.f32.mrf.mxu0
          %v1955 = vadd.f32 %v1818, %v1954
          %v1956 = vpop.f32.mrf.mxu0
          %v1957 = vadd.f32 %v1820, %v1956
          %1958 = vmatmul.bf16.gmra.mxu0 %v1561
          %v1959 = vpop.f32.mrf.mxu0
          %v1960 = vadd.f32 %v1823, %v1959
          %v1961 = vpop.f32.mrf.mxu0
          %v1962 = vadd.f32 %v1825, %v1961
          %1963 = vmatmul.bf16.gmra.mxu0 %v1562
          %v1964 = vpop.f32.mrf.mxu0
          %v1965 = vadd.f32 %v1828, %v1964
          %v1966 = vpop.f32.mrf.mxu0
          %v1967 = vadd.f32 %v1830, %v1966
          %1968 = vmatmul.bf16.gmra.mxu0 %v1563
          %v1969 = vpop.f32.mrf.mxu0
          %v1970 = vadd.f32 %v1833, %v1969
          %v1971 = vpop.f32.mrf.mxu0
          %v1972 = vadd.f32 %v1835, %v1971
          %1973 = vmatmul.bf16.gmra.mxu0 %v1564
          %v1974 = vpop.f32.mrf.mxu0
          %v1975 = vadd.f32 %v1838, %v1974
          %v1976 = vpop.f32.mrf.mxu0
          %v1977 = vadd.f32 %v1840, %v1976
          %1978 = vmatmul.bf16.gmra.mxu0 %v1565
          %v1979 = vpop.f32.mrf.mxu0
          %v1980 = vadd.f32 %v1843, %v1979
          %v1981 = vpop.f32.mrf.mxu0
          %v1982 = vadd.f32 %v1845, %v1981
          %1983 = vmatmul.bf16.gmra.mxu0 %v1566
          %v1984 = vpop.f32.mrf.mxu0
          %v1985 = vadd.f32 %v1848, %v1984
          %v1986 = vpop.f32.mrf.mxu0
          %v1987 = vadd.f32 %v1850, %v1986
          %1988 = vmatmul.bf16.gmra.mxu0 %v1567
          %v1989 = vpop.f32.mrf.mxu0
          %v1990 = vadd.f32 %v1853, %v1989
          %v1991 = vpop.f32.mrf.mxu0
          %v1992 = vadd.f32 %v1855, %v1991
          %1993 = vmatmul.bf16.gmra.mxu0 %v1568
          %v1994 = vpop.f32.mrf.mxu0
          %v1995 = vadd.f32 %v1858, %v1994
          %v1996 = vpop.f32.mrf.mxu0
          %v1997 = vadd.f32 %v1860, %v1996
          %1998 = vmatmul.bf16.gmra.mxu0 %v1569
          %v1999 = vpop.f32.mrf.mxu0
          %v2000 = vadd.f32 %v1863, %v1999
          %v2001 = vpop.f32.mrf.mxu0
          %v2002 = vadd.f32 %v1865, %v2001
          %2003 = vdwg.mxu0
          %v2004 = vld [vmem:[%s5] sm:$0x1]
          %v2006 = vperm.slane %v2004, 0
          %v2008 = vadd.f32 %v1925, %v2006
          %v2009 = vadd.f32 %v1927, %v2006
          %v2010 = vadd.f32 %v1930, %v2006
          %v2011 = vadd.f32 %v1932, %v2006
          %v2012 = vadd.f32 %v1935, %v2006
          %v2013 = vadd.f32 %v1937, %v2006
          %v2014 = vadd.f32 %v1940, %v2006
          %v2015 = vadd.f32 %v1942, %v2006
          %v2016 = vadd.f32 %v1945, %v2006
          %v2017 = vadd.f32 %v1947, %v2006
          %v2018 = vadd.f32 %v1950, %v2006
          %v2019 = vadd.f32 %v1952, %v2006
          %v2020 = vadd.f32 %v1955, %v2006
          %v2021 = vadd.f32 %v1957, %v2006
          %v2022 = vadd.f32 %v1960, %v2006
          %v2023 = vadd.f32 %v1962, %v2006
          %v2024 = vadd.f32 %v1965, %v2006
          %v2025 = vadd.f32 %v1967, %v2006
          %v2026 = vadd.f32 %v1970, %v2006
          %v2027 = vadd.f32 %v1972, %v2006
          %v2028 = vadd.f32 %v1975, %v2006
          %v2029 = vadd.f32 %v1977, %v2006
          %v2030 = vadd.f32 %v1980, %v2006
          %v2031 = vadd.f32 %v1982, %v2006
          %v2032 = vadd.f32 %v1985, %v2006
          %v2033 = vadd.f32 %v1987, %v2006
          %v2034 = vadd.f32 %v1990, %v2006
          %v2035 = vadd.f32 %v1992, %v2006
          %v2036 = vadd.f32 %v1995, %v2006
          %v2037 = vadd.f32 %v1997, %v2006
          %v2038 = vadd.f32 %v2000, %v2006
          %v2039 = vadd.f32 %v2002, %v2006
          %v2040 = vmax.f32 %v2008, 0.0
          %v2041 = vmax.f32 %v2009, 0.0
          %v2042 = vmax.f32 %v2010, 0.0
          %v2043 = vmax.f32 %v2011, 0.0
          %v2044 = vmax.f32 %v2012, 0.0
          %v2045 = vmax.f32 %v2013, 0.0
          %v2046 = vmax.f32 %v2014, 0.0
          %v2047 = vmax.f32 %v2015, 0.0
          %v2048 = vmax.f32 %v2016, 0.0
          %v2049 = vmax.f32 %v2017, 0.0
          %v2050 = vmax.f32 %v2018, 0.0
          %v2051 = vmax.f32 %v2019, 0.0
          %v2052 = vmax.f32 %v2020, 0.0
          %v2053 = vmax.f32 %v2021, 0.0
          %v2054 = vmax.f32 %v2022, 0.0
          %v2055 = vmax.f32 %v2023, 0.0
          %v2056 = vmax.f32 %v2024, 0.0
          %v2057 = vmax.f32 %v2025, 0.0
          %v2058 = vmax.f32 %v2026, 0.0
          %v2059 = vmax.f32 %v2027, 0.0
          %v2060 = vmax.f32 %v2028, 0.0
          %v2061 = vmax.f32 %v2029, 0.0
          %v2062 = vmax.f32 %v2030, 0.0
          %v2063 = vmax.f32 %v2031, 0.0
          %v2064 = vmax.f32 %v2032, 0.0
          %v2065 = vmax.f32 %v2033, 0.0
          %v2066 = vmax.f32 %v2034, 0.0
          %v2067 = vmax.f32 %v2035, 0.0
          %v2068 = vmax.f32 %v2036, 0.0
          %v2069 = vmax.f32 %v2037, 0.0
          %v2070 = vmax.f32 %v2038, 0.0
          %v2071 = vmax.f32 %v2039, 0.0
          %v2072 = vpack.c.bf16 %v2040, %v2040
          %v2073 = vpack.c.bf16 %v2041, %v2041
          %v2074 = vpack.c.bf16 %v2042, %v2042
          %v2075 = vpack.c.bf16 %v2043, %v2043
          %v2076 = vpack.c.bf16 %v2044, %v2044
          %v2077 = vpack.c.bf16 %v2045, %v2045
          %v2078 = vpack.c.bf16 %v2046, %v2046
          %v2079 = vpack.c.bf16 %v2047, %v2047
          %v2080 = vpack.c.bf16 %v2048, %v2048
          %v2081 = vpack.c.bf16 %v2049, %v2049
          %v2082 = vpack.c.bf16 %v2050, %v2050
          %v2083 = vpack.c.bf16 %v2051, %v2051
          %v2084 = vpack.c.bf16 %v2052, %v2052
          %v2085 = vpack.c.bf16 %v2053, %v2053
          %v2086 = vpack.c.bf16 %v2054, %v2054
          %v2087 = vpack.c.bf16 %v2055, %v2055
          %v2088 = vpack.c.bf16 %v2056, %v2056
          %v2089 = vpack.c.bf16 %v2057, %v2057
          %v2090 = vpack.c.bf16 %v2058, %v2058
          %v2091 = vpack.c.bf16 %v2059, %v2059
          %v2092 = vpack.c.bf16 %v2060, %v2060
          %v2093 = vpack.c.bf16 %v2061, %v2061
          %v2094 = vpack.c.bf16 %v2062, %v2062
          %v2095 = vpack.c.bf16 %v2063, %v2063
          %v2096 = vpack.c.bf16 %v2064, %v2064
          %v2097 = vpack.c.bf16 %v2065, %v2065
          %v2098 = vpack.c.bf16 %v2066, %v2066
          %v2099 = vpack.c.bf16 %v2067, %v2067
          %v2100 = vpack.c.bf16 %v2068, %v2068
          %v2101 = vpack.c.bf16 %v2069, %v2069
          %v2102 = vpack.c.bf16 %v2070, %v2070
          %v2103 = vpack.c.bf16 %v2071, %v2071
          %2104 = vst [vmem:[%s385] sm:$0xf] %v2072
          %2105 = vst [vmem:[%s385 + $0x4] sm:$0xf] %v2073
          %2106 = vst [vmem:[%s385 + $0x8] sm:$0xf] %v2074
          %2107 = vst [vmem:[%s385 + $0xc] sm:$0xf] %v2075
          %2108 = vst [vmem:[%s385 + $0x10] sm:$0xf] %v2076
          %2109 = vst [vmem:[%s385 + $0x14] sm:$0xf] %v2077
          %2110 = vst [vmem:[%s385 + $0x18] sm:$0xf] %v2078
          %2111 = vst [vmem:[%s385 + $0x1c] sm:$0xf] %v2079
          %2112 = vst [vmem:[%s385 + $0x20] sm:$0xf] %v2080
          %2113 = vst [vmem:[%s385 + $0x24] sm:$0xf] %v2081
          %2114 = vst [vmem:[%s385 + $0x28] sm:$0xf] %v2082
          %2115 = vst [vmem:[%s385 + $0x2c] sm:$0xf] %v2083
          %2116 = vst [vmem:[%s385 + $0x30] sm:$0xf] %v2084
          %2117 = vst [vmem:[%s385 + $0x34] sm:$0xf] %v2085
          %2118 = vst [vmem:[%s385 + $0x38] sm:$0xf] %v2086
          %2119 = vst [vmem:[%s385 + $0x3c] sm:$0xf] %v2087
          %2120 = vst [vmem:[%s385 + $0x40] sm:$0xf] %v2088
          %2121 = vst [vmem:[%s385 + $0x44] sm:$0xf] %v2089
          %2122 = vst [vmem:[%s385 + $0x48] sm:$0xf] %v2090
          %2123 = vst [vmem:[%s385 + $0x4c] sm:$0xf] %v2091
          %2124 = vst [vmem:[%s385 + $0x50] sm:$0xf] %v2092
          %2125 = vst [vmem:[%s385 + $0x54] sm:$0xf] %v2093
          %2126 = vst [vmem:[%s385 + $0x58] sm:$0xf] %v2094
          %2127 = vst [vmem:[%s385 + $0x5c] sm:$0xf] %v2095
          %2128 = vst [vmem:[%s385 + $0x60] sm:$0xf] %v2096
          %2129 = vst [vmem:[%s385 + $0x64] sm:$0xf] %v2097
          %2130 = vst [vmem:[%s385 + $0x68] sm:$0xf] %v2098
          %2131 = vst [vmem:[%s385 + $0x6c] sm:$0xf] %v2099
          %2132 = vst [vmem:[%s385 + $0x70] sm:$0xf] %v2100
          %2133 = vst [vmem:[%s385 + $0x74] sm:$0xf] %v2101
          %2134 = vst [vmem:[%s385 + $0x78] sm:$0xf] %v2102
          %2135 = vst [vmem:[%s385 + $0x7c] sm:$0xf] %v2103
        $region72: #{tpu_custom_call.1} parent=43 // pred_fallthru
          _
        %s2136 = sand.u32 %s188, 1
        %s2137 = scalar_lea.sflag [#allocation5], %s2136
        %s2138 = sand.u32 %s188, 1
        %s2139 = smul.addr %s2138, 128
        %s2140 = scalar_lea.vmem [#allocation12], %s2139
        // Predicated region
        $region73: #{tpu_custom_call.1} parent=43 // pred_check
          %p2141 = pneg %p198
        $region74: #{tpu_custom_call.1} parent=43 // pred_check_branch
          %2143 = sbr.rel (%p2141) target = $region76
        $region75: #{tpu_custom_call.1} parent=43 // pred_region
          %s2144 = smul.u32 32, %s29
          %2146 = vsyncadd %s2137, 0
          %s2147 = smul.addr %s2144, 4
          %s2148 = scalar_lea.hbm %s6, %s2147
          %s2149 = sshll.u32 %s2140, 4
          %s2150 = int_to_ptr.vmem [resolvable:$true] %s2149
          %s2151 = sshll.u32 %s2148, 4
          %s2152 = int_to_ptr.hbm [resolvable:$true] %s2151
          %2157 = dma.vmem_to_hbm [thread:$0]  %s2150, 2048, %s2152, %s2137, 64, 64, 4
        $region76: #{tpu_custom_call.1} parent=43 // pred_fallthru
          _
      $region44: #{tpu_custom_call.1} parent=5 // pred_fallthru
        _
      %p2158 = scmp.le.s32.totalorder 2, %s20
      // Predicated region
      $region77: #{tpu_custom_call.1} parent=5 // pred_check
        %p2159 = pneg %p2158
      $region78: #{tpu_custom_call.1} parent=5 // pred_check_branch
        %2161 = sbr.rel (%p2159) target = $region80
      $region79: #{tpu_custom_call.1} parent=5 // pred_region
        %s2162 = ssub.s32 %s20, 2
        // Predicated region
        $region81: #{tpu_custom_call.1} parent=79 // pred_check
          %p2163 = pneg %p204
        $region82: #{tpu_custom_call.1} parent=79 // pred_check_branch
          %2165 = sbr.rel (%p2163) target = $region84
        $region83: #{tpu_custom_call.1} parent=79 // pred_region
          %s2166 = sand.u32 %s189, 1
          %s2167 = scalar_lea.sflag [#allocation5], %s2166
          %s2168 = sand.u32 %s189, 1
          %s2169 = smul.addr %s2168, 128
          %s2170 = scalar_lea.vmem [#allocation12], %s2169
          %2172 = dma.done %s2167, 2048
        $region84: #{tpu_custom_call.1} parent=79 // pred_fallthru
          _
      $region80: #{tpu_custom_call.1} parent=5 // pred_fallthru
        _
    $region6: #{tpu_custom_call.1} parent=1 // loop_footer
      %s24 = sadd.s32 1, %s20
    $region7: #{tpu_custom_call.1} parent=1 // loop_footer_branch
      %19 = sbr.rel target = $region3
    $region8: #{tpu_custom_call.1} parent=1 // loop_exit
      _
    %2173 = vsyncpa [#allocation4], 1
    %s2174 = scalar_lea.sflag [#allocation4], 1
    %2175 = vsyncpa %s2174, 1
    %2176 = vsyncpa [#allocation7], 1
    %2177 = vsyncpa [#allocation11], 1
    %2178 = vsyncpa [#allocation5], 1
    %s2179 = scalar_lea.sflag [#allocation5], 1
    %2180 = vsyncpa %s2179, 1

</llo_original>
